<compile_context>
chip_gen: v7x
topology: tpu7x:2x2x1
jax: 0.10.0
libtpu: 0.0.40
codegen_flags: <defaults>
</compile_context>

<pallas_src>
from functools import partial

import jax
import jax.numpy as jnp
from jax.experimental import pallas as pl
from jax.experimental.pallas import tpu as pltpu


def _round_up(x, m):
    return ((x + m - 1) // m) * m


# ----------------------------------------------------------------------------
# Fused Pallas kernel
# ----------------------------------------------------------------------------
def _dense_ngcn_kernel(feat_ref, w_ref, b_ref, adj_ref, o_ref, base_ref, *, tr):
    """One grid step = (phase h, row tile i).

    phase 0     : base[0][rows i]   = feat_tile @ W                 (projection)
    phase h >= 1: base[h%2][rows i] = adj_tile @ base[(h-1)%2]      (one hop)
    every phase : o_tile            = freshly computed rows + bias  (last phase wins)
    """
    h = pl.program_id(0)
    i = pl.program_id(1)
    row0 = pl.multiple_of(i * tr, tr)

    # TODO(synk): training-mode dropout would use pltpu.prng_seed /
    # pltpu.prng_random_bits here; eval mode is the identity (matches module.eval()).

    @pl.when(h == 0)
    def _project():
        tile = jnp.dot(feat_ref[...], w_ref[...],
                       preferred_element_type=jnp.float32)
        base_ref[0, pl.ds(row0, tr), :] = tile.astype(base_ref.dtype)
        o_ref[...] = (tile + b_ref[...]).astype(o_ref.dtype)

    @pl.when(h > 0)
    def _hop():
        dst = h % 2
        prev = base_ref[1 - dst]                 # full resident (n_p, cout_p) bf16
        tile = jnp.dot(adj_ref[...], prev,
                       preferred_element_type=jnp.float32)
        base_ref[dst, pl.ds(row0, tr), :] = tile.astype(base_ref.dtype)
        o_ref[...] = (tile + b_ref[...]).astype(o_ref.dtype)


# ----------------------------------------------------------------------------
# Glue
# ----------------------------------------------------------------------------
def xavier_uniform(key, shape):
    fan_in, fan_out = shape[0], shape[1]
    bound = jnp.sqrt(6.0 / (fan_in + fan_out))
    return jax.random.uniform(key, shape, jnp.float32, -bound, bound)


def prepare_adjacency(adj_indices, adj_values, n, n_p):
    """Densify + pad the COO spmm operand ONCE (outside the per-call path).

    Duplicate indices sum, matching spmm/coalesce semantics.  Stored as bf16
    (the MXU operand dtype used in the kernel).
    """
    # TODO(synk): for large sparse graphs, keep block-CSR and gather only nonzero
    # column blocks via PrefetchScalarGridSpec + SMEM row pointers instead of a
    # dense (n_p, n_p) matrix.
    dense = jnp.zeros((n, n), jnp.float32).at[adj_indices[0], adj_indices[1]].add(
        adj_values)
    dense = jnp.pad(dense, ((0, n_p - n), (0, n_p - n)))
    return dense.astype(jnp.bfloat16)


@partial(jax.jit, static_argnames=("iterations", "tr"))
def dense_ngcn_forward(adj_p, features, weight, bias, *, iterations, tr=256):
    n, c_in = features.shape                     # static metadata
    c_out = weight.shape[1]
    n_p = adj_p.shape[0]
    assert adj_p.shape == (n_p, n_p) and n_p % tr == 0 and n_p >= n

    cin_p = _round_up(c_in, 128)
    cout_p = _round_up(c_out, 128)
    # TODO(synk): if the model runs several DenseNGCNLayer heads, concatenate their
    # weights/biases along the output-channel axis so the 128 padded lanes carry
    # real channels instead of zeros.

    bf16 = jnp.bfloat16
    feats_p = jnp.pad(features.astype(bf16), ((0, n_p - n), (0, cin_p - c_in)))
    w_p = jnp.pad(weight.astype(bf16), ((0, cin_p - c_in), (0, cout_p - c_out)))
    b_p = jnp.pad(bias.astype(jnp.float32), ((0, 0), (0, cout_p - c_out)))

    n_phases = int(iterations)                   # phase 0 = projection, rest = hops
    hops = n_phases - 1
    n_row_tiles = n_p // tr
    last_tile = n_row_tiles - 1

    flops = 2 * n_p * cin_p * cout_p + 2 * hops * n_p * n_p * cout_p
    bytes_accessed = (feats_p.size * 2 + w_p.size * 2 + adj_p.size * 2
                      + b_p.size * 4 + n_phases * n_p * cout_p * 4)

    out_p = pl.pallas_call(
        partial(_dense_ngcn_kernel, tr=tr),
        out_shape=jax.ShapeDtypeStruct((n_p, cout_p), jnp.float32),
        grid=(n_phases, n_row_tiles),
        in_specs=[
            # features: streamed row tiles during phase 0, then pinned to the
            # already-resident last block (no DMA) during the hop phases.
            pl.BlockSpec((tr, cin_p),
                         lambda h, i: (jnp.where(h == 0, i, last_tile), 0)),
            pl.BlockSpec((cin_p, cout_p), lambda h, i: (0, 0)),   # weight (resident)
            pl.BlockSpec((1, cout_p), lambda h, i: (0, 0)),       # bias   (resident)
            # adjacency row stripes: pinned to block 0 during the projection phase
            # (pre-stages the first hop's stripe), streamed during the hops.
            pl.BlockSpec((tr, n_p),
                         lambda h, i: (jnp.where(h > 0, i, 0), 0)),
        ],
        out_specs=pl.BlockSpec((tr, cout_p), lambda h, i: (i, 0)),
        scratch_shapes=[pltpu.VMEM((2, n_p, cout_p), jnp.bfloat16)],  # base ping-pong
        compiler_params=pltpu.CompilerParams(
            # Both axes "arbitrary": phase h+1 reads the base scratch written by
            # EVERY row tile of phase h, and scratch is per-core, so the row axis
            # cannot be megacore-sharded in this fused single-call form.
            # TODO(synk): for v7x megacore, split hops into one call each (base via
            # HBM) and mark the row axis "parallel".
            dimension_semantics=("arbitrary", "arbitrary"),
            vmem_limit_bytes=64 * 1024 * 1024,
        ),
        cost_estimate=pl.CostEstimate(flops=flops, transcendentals=0,
                                      bytes_accessed=bytes_accessed),
    )(feats_p, w_p, b_p, adj_p)

    return out_p[:n, :c_out]


# ----------------------------------------------------------------------------
# Main
# ----------------------------------------------------------------------------
if __name__ == "__main__":
    key = jax.random.PRNGKey(0)
    k_w, k_b, k_f, k_a = jax.random.split(key, 4)

    N = 300           # number of graph nodes (padded to 2 row tiles of 256)
    IN_CH = 32        # in_channels
    OUT_CH = 16       # out_channels
    ITERATIONS = 3    # adjacency matrix power order
    DROPOUT = 0.5     # unused at eval (identity)
    TR = 256          # adjacency / output row tile

    # Parameters (xavier_uniform, deterministic)
    weight = xavier_uniform(k_w, (IN_CH, OUT_CH))
    bias = xavier_uniform(k_b, (1, OUT_CH))

    # Dense feature matrix.
    features = jax.random.uniform(k_f, (N, IN_CH), jnp.float32)

    # Synthetic symmetrically-normalized adjacency with self-loops, stored as COO
    # (the module's spmm takes {'indices', 'values'}).
    a = jax.random.bernoulli(k_a, 0.05, (N, N)).astype(jnp.float32)
    a = jnp.maximum(a, a.T) + jnp.eye(N, dtype=jnp.float32)
    deg_inv_sqrt = 1.0 / jnp.sqrt(jnp.sum(a, axis=1))
    a_norm = deg_inv_sqrt[:, None] * a * deg_inv_sqrt[None, :]
    ai, aj = jnp.nonzero(a_norm)
    adj_indices = jnp.stack([ai, aj]).astype(jnp.int32)
    adj_values = a_norm[ai, aj]

    # Densify + pad the adjacency ONCE; reused across forward calls.
    n_p = _round_up(N, TR)
    adj_p = prepare_adjacency(adj_indices, adj_values, N, n_p)

    out = dense_ngcn_forward(adj_p, features, weight, bias,
                             iterations=ITERATIONS, tr=TR)
    out = jax.block_until_ready(out)
    assert out.shape == (N, OUT_CH)

    # Reference 1: same arithmetic as the kernel (bf16 operands, f32 accumulation).
    bf16 = jnp.bfloat16
    ref_bf = jnp.dot(features.astype(bf16), weight.astype(bf16),
                     preferred_element_type=jnp.float32)
    for _ in range(ITERATIONS - 1):
        ref_bf = jnp.dot(a_norm.astype(bf16), ref_bf.astype(bf16),
                         preferred_element_type=jnp.float32)
    ref_bf = ref_bf + bias

    # Reference 2: pure-f32 module semantics (mm -> [dropout identity] -> hops -> +bias).
    ref = features @ weight
    for _ in range(ITERATIONS - 1):
        ref = a_norm @ ref
    ref = ref + bias

    assert jnp.allclose(out, ref_bf, atol=2e-3, rtol=2e-3), \
        float(jnp.max(jnp.abs(out - ref_bf)))
    assert jnp.allclose(out, ref, atol=6e-2, rtol=6e-2), \
        float(jnp.max(jnp.abs(out - ref)))

    print("KERNEL_OK")
</pallas_src>

<mosaic_0001>
module attributes {stable_mosaic.version = 11 : i64} {
  func.func @_dense_ngcn_kernel(%arg0: i32, %arg1: i32, %arg2: memref<256x128xbf16, #tpu.memory_space<vmem>>, %arg3: memref<128x128xbf16, #tpu.memory_space<vmem>>, %arg4: memref<1x128xf32, #tpu.memory_space<vmem>>, %arg5: memref<256x512xbf16, #tpu.memory_space<vmem>>, %arg6: memref<256x128xf32, #tpu.memory_space<vmem>>, %arg7: memref<2x512x128xbf16, #tpu.memory_space<vmem>>) attributes {dimension_semantics = [#tpu.dimension_semantics<arbitrary>, #tpu.dimension_semantics<arbitrary>], iteration_bounds = array<i64: 3, 2>, scalar_prefetch = 0 : i64, scratch_operands = 1 : i64, tpu.core_type = #tpu.core_type<tc>, window_params = [{transform_indices = @transform_0, window_bounds = array<i64: 256, 128>}, {pipeline_mode = #tpu.pipeline_mode<synchronous>, transform_indices = @transform_1, window_bounds = array<i64: 128, 128>}, {pipeline_mode = #tpu.pipeline_mode<synchronous>, transform_indices = @transform_2, window_bounds = array<i64: 1, 128>}, {transform_indices = @transform_3, window_bounds = array<i64: 256, 512>}, {transform_indices = @transform_4, window_bounds = array<i64: 256, 128>}]} {
    %c256_i32 = arith.constant 256 : i32
    %0 = arith.muli %arg1, %c256_i32 : i32
    %1 = tpu.assume_multiple %0, 256 : i32
    %c0_i32 = arith.constant 0 : i32
    %2 = arith.cmpi eq, %arg0, %c0_i32 : i32
    %3 = arith.extui %2 : i1 to i32
    %c0_i32_0 = arith.constant 0 : i32
    %4 = arith.cmpi ne, %3, %c0_i32_0 : i32
    scf.if %4 {
      %c0 = arith.constant 0 : index
      %c0_3 = arith.constant 0 : index
      %8 = vector.load %arg2[%c0, %c0_3] : memref<256x128xbf16, #tpu.memory_space<vmem>>, vector<256x128xbf16>
      %c0_4 = arith.constant 0 : index
      %c0_5 = arith.constant 0 : index
      %9 = vector.load %arg3[%c0_4, %c0_5] : memref<128x128xbf16, #tpu.memory_space<vmem>>, vector<128x128xbf16>
      %cst = arith.constant dense<0.000000e+00> : vector<256x128xf32>
      %10 = tpu.matmul %8, %9, %cst {dimension_numbers = #tpu.dot_dimension_numbers<[1], [0], [0], [1], [0, 0, 1, 1], [], []>} : vector<256x128xbf16>, vector<128x128xbf16>, vector<256x128xf32> -> vector<256x128xf32>
      %11 = arith.truncf %10 : vector<256x128xf32> to vector<256x128xbf16>
      %c0_6 = arith.constant 0 : index
      %12 = arith.index_cast %1 : i32 to index
      %c0_7 = arith.constant 0 : index
      %13 = vector.load %arg7[%c0_6, %12, %c0_7] : memref<2x512x128xbf16, #tpu.memory_space<vmem>>, vector<1x256x128xbf16>
      %14 = vector.shape_cast %13 : vector<1x256x128xbf16> to vector<256x128xbf16>
      %15 = vector.shape_cast %11 : vector<256x128xbf16> to vector<1x256x128xbf16>
      tpu.vector_store %arg7[%c0_6, %12, %c0_7], %15 {strides = array<i32>} : memref<2x512x128xbf16, #tpu.memory_space<vmem>>, vector<1x256x128xbf16>,
      %c0_8 = arith.constant 0 : index
      %c0_9 = arith.constant 0 : index
      %16 = vector.load %arg4[%c0_8, %c0_9] : memref<1x128xf32, #tpu.memory_space<vmem>>, vector<1x128xf32>
      %17 = vector.broadcast %16 : vector<1x128xf32> to vector<256x128xf32>
      %18 = arith.addf %10, %17 : vector<256x128xf32>
      %c0_10 = arith.constant 0 : index
      %c0_11 = arith.constant 0 : index
      %19 = vector.load %arg6[%c0_10, %c0_11] : memref<256x128xf32, #tpu.memory_space<vmem>>, vector<256x128xf32>
      tpu.vector_store %arg6[%c0_10, %c0_11], %18 {strides = array<i32>} : memref<256x128xf32, #tpu.memory_space<vmem>>, vector<256x128xf32>,
    } else {
    }
    %c0_i32_1 = arith.constant 0 : i32
    %5 = arith.cmpi sgt, %arg0, %c0_i32_1 : i32
    %6 = arith.extui %5 : i1 to i32
    %c0_i32_2 = arith.constant 0 : i32
    %7 = arith.cmpi ne, %6, %c0_i32_2 : i32
    scf.if %7 {
      %c2_i32 = arith.constant 2 : i32
      %c0_i32_3 = arith.constant 0 : i32
      %8 = arith.cmpi eq, %c2_i32, %c0_i32_3 : i32
      %c1_i32 = arith.constant 1 : i32
      %9 = arith.select %8, %c1_i32, %c2_i32 : i32
      %10 = arith.remsi %arg0, %9 : i32
      %c0_i32_4 = arith.constant 0 : i32
      %11 = arith.cmpi ne, %10, %c0_i32_4 : i32
      %c0_i32_5 = arith.constant 0 : i32
      %12 = arith.cmpi slt, %10, %c0_i32_5 : i32
      %c0_i32_6 = arith.constant 0 : i32
      %13 = arith.cmpi slt, %9, %c0_i32_6 : i32
      %14 = arith.xori %12, %13 : i1
      %15 = arith.andi %14, %11 : i1
      %16 = arith.addi %10, %9 : i32
      %17 = arith.select %15, %16, %10 : i32
      %c1_i32_7 = arith.constant 1 : i32
      %18 = arith.subi %c1_i32_7, %17 : i32
      %19 = arith.index_cast %18 : i32 to index
      %c0 = arith.constant 0 : index
      %c0_8 = arith.constant 0 : index
      %20 = vector.load %arg7[%19, %c0, %c0_8] : memref<2x512x128xbf16, #tpu.memory_space<vmem>>, vector<1x512x128xbf16>
      %21 = vector.shape_cast %20 : vector<1x512x128xbf16> to vector<512x128xbf16>
      %c0_9 = arith.constant 0 : index
      %c0_10 = arith.constant 0 : index
      %22 = vector.load %arg5[%c0_9, %c0_10] : memref<256x512xbf16, #tpu.memory_space<vmem>>, vector<256x512xbf16>
      %cst = arith.constant dense<0.000000e+00> : vector<256x128xf32>
      %23 = tpu.matmul %22, %21, %cst {dimension_numbers = #tpu.dot_dimension_numbers<[1], [0], [0], [1], [0, 0, 1, 1], [], []>} : vector<256x512xbf16>, vector<512x128xbf16>, vector<256x128xf32> -> vector<256x128xf32>
      %24 = arith.truncf %23 : vector<256x128xf32> to vector<256x128xbf16>
      %25 = arith.index_cast %17 : i32 to index
      %26 = arith.index_cast %1 : i32 to index
      %c0_11 = arith.constant 0 : index
      %27 = vector.load %arg7[%25, %26, %c0_11] : memref<2x512x128xbf16, #tpu.memory_space<vmem>>, vector<1x256x128xbf16>
      %28 = vector.shape_cast %27 : vector<1x256x128xbf16> to vector<256x128xbf16>
      %29 = vector.shape_cast %24 : vector<256x128xbf16> to vector<1x256x128xbf16>
      tpu.vector_store %arg7[%25, %26, %c0_11], %29 {strides = array<i32>} : memref<2x512x128xbf16, #tpu.memory_space<vmem>>, vector<1x256x128xbf16>,
      %c0_12 = arith.constant 0 : index
      %c0_13 = arith.constant 0 : index
      %30 = vector.load %arg4[%c0_12, %c0_13] : memref<1x128xf32, #tpu.memory_space<vmem>>, vector<1x128xf32>
      %31 = vector.broadcast %30 : vector<1x128xf32> to vector<256x128xf32>
      %32 = arith.addf %23, %31 : vector<256x128xf32>
      %c0_14 = arith.constant 0 : index
      %c0_15 = arith.constant 0 : index
      %33 = vector.load %arg6[%c0_14, %c0_15] : memref<256x128xf32, #tpu.memory_space<vmem>>, vector<256x128xf32>
      tpu.vector_store %arg6[%c0_14, %c0_15], %32 {strides = array<i32>} : memref<256x128xf32, #tpu.memory_space<vmem>>, vector<256x128xf32>,
    } else {
    }
    return
  }
  func.func @transform_0(%arg0: i32, %arg1: i32) -> (i32, i32) {
    %c0_i32 = arith.constant 0 : i32
    %0 = arith.cmpi eq, %arg0, %c0_i32 : i32
    %c1_i32 = arith.constant 1 : i32
    %1 = arith.select %0, %arg1, %c1_i32 : i32
    %c0_i32_0 = arith.constant 0 : i32
    %c0_i32_1 = arith.constant 0 : i32
    return %1, %c0_i32_0 : i32, i32
  }
  func.func @transform_1(%arg0: i32, %arg1: i32) -> (i32, i32) {
    %c0_i32 = arith.constant 0 : i32
    %c0_i32_0 = arith.constant 0 : i32
    %c0_i32_1 = arith.constant 0 : i32
    return %c0_i32, %c0_i32_0 : i32, i32
  }
  func.func @transform_2(%arg0: i32, %arg1: i32) -> (i32, i32) {
    %c0_i32 = arith.constant 0 : i32
    %c0_i32_0 = arith.constant 0 : i32
    %c0_i32_1 = arith.constant 0 : i32
    return %c0_i32, %c0_i32_0 : i32, i32
  }
  func.func @transform_3(%arg0: i32, %arg1: i32) -> (i32, i32) {
    %c0_i32 = arith.constant 0 : i32
    %0 = arith.cmpi sgt, %arg0, %c0_i32 : i32
    %c0_i32_0 = arith.constant 0 : i32
    %1 = arith.select %0, %arg1, %c0_i32_0 : i32
    %c0_i32_1 = arith.constant 0 : i32
    %c0_i32_2 = arith.constant 0 : i32
    return %1, %c0_i32_1 : i32, i32
  }
  func.func @transform_4(%arg0: i32, %arg1: i32) -> (i32, i32) {
    %c0_i32 = arith.constant 0 : i32
    %c0_i32_0 = arith.constant 0 : i32
    return %arg1, %c0_i32 : i32, i32
  }
}

</mosaic_0001>

<llo_original>
// kernel: dense_ngcn_forward.1
$region0: #{dense_ngcn_forward.1}
  #allocation0 [shape = 'u32[]', space=smem, size = 0x4, offset = 0x4, fixed_abs, tag = 'smem constant byte address 0x4 - core index']
  #allocation1 [shape = 'u32[144,128]{1,0:T(1,128)}', space=vmem, size = 0x12000, scoped, tag = 'internal scratch']
  #allocation2 [shape = 'bf16[2,512,128]{2,1,0:T(16,128)(2,1)}', space=vmem, size = 0x40000, scoped, tag = 'scratch operand']
  %s0 = inlined_call_operand.hbm [shape: bf16[512,128], index: 0, kind: input, shape index: {}]
  %s1 = inlined_call_operand.hbm [shape: bf16[128,128], index: 1, kind: input, shape index: {}]
  %s2 = inlined_call_operand.hbm [shape: f32[1,128], index: 2, kind: input, shape index: {}]
  %s3 = inlined_call_operand.hbm [shape: bf16[512,512], index: 3, kind: input, shape index: {}]
  %s4 = inlined_call_operand.hbm [shape: f32[512,128], index: 4, kind: output, shape index: {}]
  %s5 = sld [smem:[#allocation0]]
  $region73: #{dense_ngcn_forward.1} parent=0
    _
  %s7 = ssub.s32 1, %s5
  %s8 = scalar_select 0, %s7, %s5
  $region1: #{dense_ngcn_forward.1} parent=0
    #allocation3 [shape = 'u8[131072]{0}', space=vmem, size = 0x20000, scoped, tag = 'input window, operand 0']
    #allocation4 [shape = 's32[2]{0}', space=sflag, size = 0x8, scoped, tag = 'scoped memory for dense_ngcn_forward.1']
    #allocation5 [shape = 's32[2]{0}', space=sflag, size = 0x8, scoped, tag = 'scoped memory for dense_ngcn_forward.1']
    #allocation6 [shape = 'u8[32768]{0}', space=vmem, size = 0x8000, scoped, tag = 'input window, operand 1, single buffered']
    #allocation7 [shape = 's32[1]{0}', space=sflag, size = 0x4, scoped, tag = 'scoped memory for dense_ngcn_forward.1']
    #allocation8 [shape = 'u8[512]{0}', space=vmem, size = 0x400, scoped, tag = 'input window, operand 2, single buffered']
    #allocation9 [shape = 'u8[524288]{0}', space=vmem, size = 0x80000, scoped, tag = 'input window, operand 3']
    #allocation10 [shape = 's32[2]{0}', space=sflag, size = 0x8, scoped, tag = 'scoped memory for dense_ngcn_forward.1']
    #allocation11 [shape = 'u8[262144]{0}', space=vmem, size = 0x40000, scoped, tag = 'output window, operand 0']
    %9 = vsyncpa [#allocation4], 0
    %s10 = scalar_lea.sflag [#allocation4], 1
    %11 = vsyncpa %s10, 0
    %12 = vsyncpa [#allocation7], 0
    %13 = vsyncpa [#allocation10], 0
    %s14 = scalar_lea.sflag [#allocation10], 1
    %15 = vsyncpa %s14, 0
    %16 = vsyncpa [#allocation5], 0
    %s17 = scalar_lea.sflag [#allocation5], 1
    %18 = vsyncpa %s17, 0
    loop: start=0, step=1, limit=8
    $region2: #{dense_ngcn_forward.1} parent=1 // loop_pre_header
      _
    $region3: #{dense_ngcn_forward.1} parent=1 // loop_header
      %s20 = sphi 0, %s24
      %p21 = scmp.ge.s32.totalorder %s20, 8
      %s27 = sphi 0, %s39
      %s28 = sphi 0, %s35
      %s29 = sphi 0, %s27
      %s30 = sphi 0, %s28
      %s31 = sphi 0, %s29
      %s32 = sphi 0, %s30
      %s46 = sphi 0, %s48
      %s49 = sphi 0, %s46
      %s50 = sphi 0, %s49
      %s66 = sphi 0, %s50
      %s70 = sphi 0, %s70
      %s72 = sphi 0, %s70
      %s73 = sphi 0, %s72
      %s87 = sphi 0, %s73
      %s91 = sphi 0, %s91
      %s93 = sphi 0, %s91
      %s94 = sphi 0, %s93
      %s108 = sphi 0, %s94
      %s118 = sphi 0, %s120
      %s121 = sphi 0, %s118
      %s122 = sphi 0, %s121
      %s138 = sphi 0, %s122
      %s144 = sphi 0, %s146
      %s147 = sphi 0, %s144
      %s148 = sphi 0, %s147
      %s164 = sphi 0, %s148
    $region4: #{dense_ngcn_forward.1} parent=1 // loop_header_branch
      %23 = sbr.rel (%p21) target = $region8
    $region5: #{dense_ngcn_forward.1} parent=1 // loop_body
      %s25 = ssub.s32 %s20, 1
      %s26 = ssub.s32 %s20, 2
      %s33 = sadd.s32 1, %s28
      %p34 = scmp.ge.s32.totalorder %s33, 2
      %s35 = scalar_select %p34, 0, %s33
      %s36 = sadd.s32 1, %s27
      %s37 = scalar_select %p34, %s36, %s27
      %p38 = scmp.ge.s32.totalorder %s37, 3
      %s39 = scalar_select %p38, 0, %s37
      %p40 = scmp.eq.s32.totalorder %s27, 0
      %s41 = scalar_select %p40, %s28, 1
      %p42 = scmp.eq.s32.totalorder %s39, 0
      %s43 = scalar_select %p42, %s35, 1
      %s44 = ssub.s32 %s41, %s43
      %p45 = scmp.eq.s32.totalorder %s44, 0
      %s47 = sadd.s32 %s46, 1
      %s48 = scalar_select %p45, %s46, %s47
      %p51 = pneg %p45
      %p52 = scmp.eq.s32.totalorder %s20, 5
      %p53 = por %p51, %p52
      %p54 = scmp.ne.s32.totalorder %s46, %s49
      %p55 = scmp.eq.s32.totalorder %s20, 0
      %p56 = por %p54, %p55
      %p57 = scmp.ne.s32.totalorder %s46, %s49
      %p58 = scmp.eq.s32.totalorder %s25, 5
      %p59 = por %p57, %p58
      %p60 = scmp.ne.s32.totalorder %s49, %s50
      %p61 = scmp.eq.s32.totalorder %s25, 0
      %p62 = por %p60, %p61
      %p63 = scmp.ne.s32.totalorder %s49, %s50
      %p64 = scmp.eq.s32.totalorder %s26, 5
      %p65 = por %p63, %p64
      %p67 = scmp.ne.s32.totalorder %s50, %s66
      %p68 = scmp.eq.s32.totalorder %s26, 0
      %p69 = por %p67, %p68
      %s71 = sadd.s32 %s70, 1
      %p74 = scmp.eq.s32.totalorder %s20, 5
      %p75 = scmp.ne.s32.totalorder %s70, %s72
      %p76 = scmp.eq.s32.totalorder %s20, 0
      %p77 = por %p75, %p76
      %p78 = scmp.ne.s32.totalorder %s70, %s72
      %p79 = scmp.eq.s32.totalorder %s25, 5
      %p80 = por %p78, %p79
      %p81 = scmp.ne.s32.totalorder %s72, %s73
      %p82 = scmp.eq.s32.totalorder %s25, 0
      %p83 = por %p81, %p82
      %p84 = scmp.ne.s32.totalorder %s72, %s73
      %p85 = scmp.eq.s32.totalorder %s26, 5
      %p86 = por %p84, %p85
      %p88 = scmp.ne.s32.totalorder %s73, %s87
      %p89 = scmp.eq.s32.totalorder %s26, 0
      %p90 = por %p88, %p89
      %s92 = sadd.s32 %s91, 1
      %p95 = scmp.eq.s32.totalorder %s20, 5
      %p96 = scmp.ne.s32.totalorder %s91, %s93
      %p97 = scmp.eq.s32.totalorder %s20, 0
      %p98 = por %p96, %p97
      %p99 = scmp.ne.s32.totalorder %s91, %s93
      %p100 = scmp.eq.s32.totalorder %s25, 5
      %p101 = por %p99, %p100
      %p102 = scmp.ne.s32.totalorder %s93, %s94
      %p103 = scmp.eq.s32.totalorder %s25, 0
      %p104 = por %p102, %p103
      %p105 = scmp.ne.s32.totalorder %s93, %s94
      %p106 = scmp.eq.s32.totalorder %s26, 5
      %p107 = por %p105, %p106
      %p109 = scmp.ne.s32.totalorder %s94, %s108
      %p110 = scmp.eq.s32.totalorder %s26, 0
      %p111 = por %p109, %p110
      %p112 = scmp.gt.s32.totalorder %s27, 0
      %s113 = scalar_select %p112, %s28, 0
      %p114 = scmp.gt.s32.totalorder %s39, 0
      %s115 = scalar_select %p114, %s35, 0
      %s116 = ssub.s32 %s113, %s115
      %p117 = scmp.eq.s32.totalorder %s116, 0
      %s119 = sadd.s32 %s118, 1
      %s120 = scalar_select %p117, %s118, %s119
      %p123 = pneg %p117
      %p124 = scmp.eq.s32.totalorder %s20, 5
      %p125 = por %p123, %p124
      %p126 = scmp.ne.s32.totalorder %s118, %s121
      %p127 = scmp.eq.s32.totalorder %s20, 0
      %p128 = por %p126, %p127
      %p129 = scmp.ne.s32.totalorder %s118, %s121
      %p130 = scmp.eq.s32.totalorder %s25, 5
      %p131 = por %p129, %p130
      %p132 = scmp.ne.s32.totalorder %s121, %s122
      %p133 = scmp.eq.s32.totalorder %s25, 0
      %p134 = por %p132, %p133
      %p135 = scmp.ne.s32.totalorder %s121, %s122
      %p136 = scmp.eq.s32.totalorder %s26, 5
      %p137 = por %p135, %p136
      %p139 = scmp.ne.s32.totalorder %s122, %s138
      %p140 = scmp.eq.s32.totalorder %s26, 0
      %p141 = por %p139, %p140
      %s142 = ssub.s32 %s28, %s35
      %p143 = scmp.eq.s32.totalorder %s142, 0
      %s145 = sadd.s32 %s144, 1
      %s146 = scalar_select %p143, %s144, %s145
      %p149 = pneg %p143
      %p150 = scmp.eq.s32.totalorder %s20, 5
      %p151 = por %p149, %p150
      %p152 = scmp.ne.s32.totalorder %s144, %s147
      %p153 = scmp.eq.s32.totalorder %s20, 0
      %p154 = por %p152, %p153
      %p155 = scmp.ne.s32.totalorder %s144, %s147
      %p156 = scmp.eq.s32.totalorder %s25, 5
      %p157 = por %p155, %p156
      %p158 = scmp.ne.s32.totalorder %s147, %s148
      %p159 = scmp.eq.s32.totalorder %s25, 0
      %p160 = por %p158, %p159
      %p161 = scmp.ne.s32.totalorder %s147, %s148
      %p162 = scmp.eq.s32.totalorder %s26, 5
      %p163 = por %p161, %p162
      %p165 = scmp.ne.s32.totalorder %s148, %s164
      %p166 = scmp.eq.s32.totalorder %s26, 0
      %p167 = por %p165, %p166
      %p168 = scmp.le.s32.totalorder 1, %s20
      %p169 = scmp.lt.s32.totalorder %s20, 7
      %p170 = pnand %p168, %p169
      %p171 = pneg %p170
      // Predicated region
      $region9: #{dense_ngcn_forward.1} parent=5 // pred_check
        _
      $region10: #{dense_ngcn_forward.1} parent=5 // pred_check_branch
        %173 = sbr.rel (%p170) target = $region12
      $region11: #{dense_ngcn_forward.1} parent=5 // pred_region
        %s174 = ssub.s32 %s20, 1
        // Predicated region
        $region13: #{dense_ngcn_forward.1} parent=11 // pred_check
          %p175 = pneg %p83
        $region14: #{dense_ngcn_forward.1} parent=11 // pred_check_branch
          %177 = sbr.rel (%p175) target = $region16
        $region15: #{dense_ngcn_forward.1} parent=11 // pred_region
          %s179 = ssub.s32 1024, 1024
          %180 = vsyncadd [#allocation7], %s179
          %s181 = sshll.u32 [#allocation6], 4
          %s182 = int_to_ptr.vmem [resolvable:$true] %s181
          %187 = dma.hbm_to_vmem [thread:$0]  %s1, 1024, %s182, [#allocation7], 64, 64, 4
        $region16: #{dense_ngcn_forward.1} parent=11 // pred_fallthru
          _
        // Predicated region
        $region17: #{dense_ngcn_forward.1} parent=11 // pred_check
          %p188 = pneg %p104
        $region18: #{dense_ngcn_forward.1} parent=11 // pred_check_branch
          %190 = sbr.rel (%p188) target = $region20
        $region19: #{dense_ngcn_forward.1} parent=11 // pred_region
          %s192 = ssub.s32 16, 16
          %193 = vsyncadd [#allocation7], %s192
          %s195 = sshll.u32 [#allocation8], 4
          %s196 = int_to_ptr.vmem [resolvable:$true] %s195
          %198 = dma.hbm_to_vmem [thread:$0]  %s2, 16, %s196, [#allocation7]
        $region20: #{dense_ngcn_forward.1} parent=11 // pred_fallthru
          _
      $region12: #{dense_ngcn_forward.1} parent=5 // pred_fallthru
        _
      %p199 = scmp.lt.s32.totalorder %s20, 6
      // Predicated region
      $region21: #{dense_ngcn_forward.1} parent=5 // pred_check
        %p200 = pneg %p199
      $region22: #{dense_ngcn_forward.1} parent=5 // pred_check_branch
        %202 = sbr.rel (%p200) target = $region24
      $region23: #{dense_ngcn_forward.1} parent=5 // pred_region
        // Predicated region
        $region25: #{dense_ngcn_forward.1} parent=23 // pred_check
          %p203 = pneg %p56
        $region26: #{dense_ngcn_forward.1} parent=23 // pred_check_branch
          %205 = sbr.rel (%p203) target = $region28
        $region27: #{dense_ngcn_forward.1} parent=23 // pred_region
          %s206 = sand.u32 %s46, 1
          %s207 = scalar_lea.sflag [#allocation4], %s206
          %s208 = sand.u32 %s46, 1
          %s209 = smul.addr %s208, 128
          %s210 = scalar_lea.vmem [#allocation3], %s209
          %p211 = scmp.eq.s32.totalorder %s27, 0
          %s212 = scalar_select %p211, %s28, 1
          %s213 = smul.u32 32, %s212
          %s215 = ssub.s32 2048, 2048
          %216 = vsyncadd %s207, %s215
          %s217 = smul.addr %s213, 64
          %s218 = scalar_lea.hbm %s0, %s217
          %s219 = sshll.u32 %s210, 4
          %s220 = int_to_ptr.vmem [resolvable:$true] %s219
          %225 = dma.hbm_to_vmem [thread:$0]  %s218, 2048, %s220, %s207, 64, 64, 4
        $region28: #{dense_ngcn_forward.1} parent=23 // pred_fallthru
          _
        // Predicated region
        $region29: #{dense_ngcn_forward.1} parent=23 // pred_check
          %p226 = pneg %p128
        $region30: #{dense_ngcn_forward.1} parent=23 // pred_check_branch
          %228 = sbr.rel (%p226) target = $region32
        $region31: #{dense_ngcn_forward.1} parent=23 // pred_region
          %s229 = sand.u32 %s118, 1
          %s230 = scalar_lea.sflag [#allocation10], %s229
          %s231 = sand.u32 %s118, 1
          %s232 = smul.addr %s231, 512
          %s233 = scalar_lea.vmem [#allocation9], %s232
          %p234 = scmp.gt.s32.totalorder %s27, 0
          %s235 = scalar_select %p234, %s28, 0
          %s236 = smul.u32 32, %s235
          %s238 = ssub.s32 8192, 8192
          %239 = vsyncadd %s230, %s238
          %s240 = smul.addr %s236, 4
          %s241 = smul.addr %s240, 64
          %s242 = scalar_lea.hbm %s3, %s241
          %s243 = sshll.u32 %s233, 4
          %s244 = int_to_ptr.vmem [resolvable:$true] %s243
          %249 = dma.hbm_to_vmem [thread:$0]  %s242, 8192, %s244, %s230, 256, 256, 16
        $region32: #{dense_ngcn_forward.1} parent=23 // pred_fallthru
          _
      $region24: #{dense_ngcn_forward.1} parent=5 // pred_fallthru
        _
      %p250 = scmp.le.s32.totalorder 1, %s20
      %p251 = scmp.lt.s32.totalorder %s20, 7
      %p252 = pnand %p250, %p251
      %p253 = pneg %p252
      // Predicated region
      $region33: #{dense_ngcn_forward.1} parent=5 // pred_check
        _
      $region34: #{dense_ngcn_forward.1} parent=5 // pred_check_branch
        %255 = sbr.rel (%p252) target = $region36
      $region35: #{dense_ngcn_forward.1} parent=5 // pred_region
        %s256 = ssub.s32 %s20, 1
        %s257 = sand.u32 %s49, 1
        %s258 = scalar_lea.sflag [#allocation4], %s257
        %s259 = sand.u32 %s49, 1
        %s260 = smul.addr %s259, 128
        %s261 = scalar_lea.vmem [#allocation3], %s260
        // Predicated region
        $region37: #{dense_ngcn_forward.1} parent=35 // pred_check
          %p262 = pneg %p62
        $region38: #{dense_ngcn_forward.1} parent=35 // pred_check_branch
          %264 = sbr.rel (%p262) target = $region40
        $region39: #{dense_ngcn_forward.1} parent=35 // pred_region
          %265 = dma.done %s258, 2048
        $region40: #{dense_ngcn_forward.1} parent=35 // pred_fallthru
          _
        // Predicated region
        $region41: #{dense_ngcn_forward.1} parent=35 // pred_check
          %p266 = pneg %p83
        $region42: #{dense_ngcn_forward.1} parent=35 // pred_check_branch
          %268 = sbr.rel (%p266) target = $region44
        $region43: #{dense_ngcn_forward.1} parent=35 // pred_region
          %269 = dma.done [#allocation7], 1024
        $region44: #{dense_ngcn_forward.1} parent=35 // pred_fallthru
          _
        // Predicated region
        $region45: #{dense_ngcn_forward.1} parent=35 // pred_check
          %p270 = pneg %p104
        $region46: #{dense_ngcn_forward.1} parent=35 // pred_check_branch
          %272 = sbr.rel (%p270) target = $region48
        $region47: #{dense_ngcn_forward.1} parent=35 // pred_region
          %273 = dma.done [#allocation7], 16
        $region48: #{dense_ngcn_forward.1} parent=35 // pred_fallthru
          _
        %s274 = sand.u32 %s121, 1
        %s275 = scalar_lea.sflag [#allocation10], %s274
        %s276 = sand.u32 %s121, 1
        %s277 = smul.addr %s276, 512
        %s278 = scalar_lea.vmem [#allocation9], %s277
        // Predicated region
        $region49: #{dense_ngcn_forward.1} parent=35 // pred_check
          %p279 = pneg %p134
        $region50: #{dense_ngcn_forward.1} parent=35 // pred_check_branch
          %281 = sbr.rel (%p279) target = $region52
        $region51: #{dense_ngcn_forward.1} parent=35 // pred_region
          %282 = dma.done %s275, 8192
        $region52: #{dense_ngcn_forward.1} parent=35 // pred_fallthru
          _
        %s283 = sand.u32 %s49, 1
        %s284 = scalar_lea.sflag [#allocation4], %s283
        %s285 = sand.u32 %s49, 1
        %s286 = smul.addr %s285, 128
        %s287 = scalar_lea.vmem [#allocation3], %s286
        %p288 = pneg %p62
        %p289 = pneg %p59
        %p290 = pneg %p83
        %p291 = pneg %p80
        %p292 = pneg %p104
        %p293 = pneg %p101
        %s294 = sand.u32 %s121, 1
        %s295 = scalar_lea.sflag [#allocation10], %s294
        %s296 = sand.u32 %s121, 1
        %s297 = smul.addr %s296, 512
        %s298 = scalar_lea.vmem [#allocation9], %s297
        %p299 = pneg %p134
        %p300 = pneg %p131
        %p301 = pneg %p160
        %p302 = pneg %p157
        %s303 = sand.u32 %s147, 1
        %s304 = scalar_lea.sflag [#allocation5], %s303
        %s305 = sand.u32 %s147, 1
        %s306 = smul.addr %s305, 256
        %s307 = scalar_lea.vmem [#allocation11], %s306
        %p308 = scmp.eq.s32.totalorder %s29, 0
        %s309 = scalar_select %p308, %s30, 1
        %s310 = smul.u32 32, %s309
        %p311 = scmp.gt.s32.totalorder %s29, 0
        %s312 = scalar_select %p311, %s30, 0
        %s313 = smul.u32 32, %s312
        %s314 = smul.u32 32, %s30
        %s316 = smul.u32 %s30, 256
        %p317 = scmp.eq.s32.totalorder %s29, 0
        // Predicated region
        $region53: #{dense_ngcn_forward.1} parent=35 // pred_check
          %p318 = pneg %p317
        $region54: #{dense_ngcn_forward.1} parent=35 // pred_check_branch
          %320 = sbr.rel (%p318) target = $region56
        $region55: #{dense_ngcn_forward.1} parent=35 // pred_region
          %v321 = vld [vmem:[%s261] sm:$0xf]
          %v322 = vld [vmem:[%s261 + $0x4] sm:$0xf]
          %v323 = vld [vmem:[%s261 + $0x8] sm:$0xf]
          %v324 = vld [vmem:[%s261 + $0xc] sm:$0xf]
          %v325 = vld [vmem:[%s261 + $0x10] sm:$0xf]
          %v326 = vld [vmem:[%s261 + $0x14] sm:$0xf]
          %v327 = vld [vmem:[%s261 + $0x18] sm:$0xf]
          %v328 = vld [vmem:[%s261 + $0x1c] sm:$0xf]
          %v329 = vld [vmem:[%s261 + $0x20] sm:$0xf]
          %v330 = vld [vmem:[%s261 + $0x24] sm:$0xf]
          %v331 = vld [vmem:[%s261 + $0x28] sm:$0xf]
          %v332 = vld [vmem:[%s261 + $0x2c] sm:$0xf]
          %v333 = vld [vmem:[%s261 + $0x30] sm:$0xf]
          %v334 = vld [vmem:[%s261 + $0x34] sm:$0xf]
          %v335 = vld [vmem:[%s261 + $0x38] sm:$0xf]
          %v336 = vld [vmem:[%s261 + $0x3c] sm:$0xf]
          %v337 = vld [vmem:[%s261 + $0x40] sm:$0xf]
          %v338 = vld [vmem:[%s261 + $0x44] sm:$0xf]
          %v339 = vld [vmem:[%s261 + $0x48] sm:$0xf]
          %v340 = vld [vmem:[%s261 + $0x4c] sm:$0xf]
          %v341 = vld [vmem:[%s261 + $0x50] sm:$0xf]
          %v342 = vld [vmem:[%s261 + $0x54] sm:$0xf]
          %v343 = vld [vmem:[%s261 + $0x58] sm:$0xf]
          %v344 = vld [vmem:[%s261 + $0x5c] sm:$0xf]
          %v345 = vld [vmem:[%s261 + $0x60] sm:$0xf]
          %v346 = vld [vmem:[%s261 + $0x64] sm:$0xf]
          %v347 = vld [vmem:[%s261 + $0x68] sm:$0xf]
          %v348 = vld [vmem:[%s261 + $0x6c] sm:$0xf]
          %v349 = vld [vmem:[%s261 + $0x70] sm:$0xf]
          %v350 = vld [vmem:[%s261 + $0x74] sm:$0xf]
          %v351 = vld [vmem:[%s261 + $0x78] sm:$0xf]
          %v352 = vld [vmem:[%s261 + $0x7c] sm:$0xf]
          %v353 = vld [vmem:[#allocation6] sm:$0xf]
          %v354 = vld [vmem:[#allocation6 + $0x4] sm:$0xf]
          %v355 = vld [vmem:[#allocation6 + $0x8] sm:$0xf]
          %v356 = vld [vmem:[#allocation6 + $0xc] sm:$0xf]
          %v357 = vld [vmem:[#allocation6 + $0x10] sm:$0xf]
          %v358 = vld [vmem:[#allocation6 + $0x14] sm:$0xf]
          %v359 = vld [vmem:[#allocation6 + $0x18] sm:$0xf]
          %v360 = vld [vmem:[#allocation6 + $0x1c] sm:$0xf]
          %v361 = vld [vmem:[#allocation6 + $0x20] sm:$0xf]
          %v362 = vld [vmem:[#allocation6 + $0x24] sm:$0xf]
          %v363 = vld [vmem:[#allocation6 + $0x28] sm:$0xf]
          %v364 = vld [vmem:[#allocation6 + $0x2c] sm:$0xf]
          %v365 = vld [vmem:[#allocation6 + $0x30] sm:$0xf]
          %v366 = vld [vmem:[#allocation6 + $0x34] sm:$0xf]
          %v367 = vld [vmem:[#allocation6 + $0x38] sm:$0xf]
          %v368 = vld [vmem:[#allocation6 + $0x3c] sm:$0xf]
          %v401 = vunpack.c.l.b16 %v321
          %v402 = vunpack.c.l.b16 %v322
          %v403 = vunpack.c.l.b16 %v323
          %v404 = vunpack.c.l.b16 %v324
          %v405 = vunpack.c.l.b16 %v325
          %v406 = vunpack.c.l.b16 %v326
          %v407 = vunpack.c.l.b16 %v327
          %v408 = vunpack.c.l.b16 %v328
          %v409 = vunpack.c.l.b16 %v329
          %v410 = vunpack.c.l.b16 %v330
          %v411 = vunpack.c.l.b16 %v331
          %v412 = vunpack.c.l.b16 %v332
          %v413 = vunpack.c.l.b16 %v333
          %v414 = vunpack.c.l.b16 %v334
          %v415 = vunpack.c.l.b16 %v335
          %v416 = vunpack.c.l.b16 %v336
          %v417 = vunpack.c.l.b16 %v337
          %v418 = vunpack.c.l.b16 %v338
          %v419 = vunpack.c.l.b16 %v339
          %v420 = vunpack.c.l.b16 %v340
          %v421 = vunpack.c.l.b16 %v341
          %v422 = vunpack.c.l.b16 %v342
          %v423 = vunpack.c.l.b16 %v343
          %v424 = vunpack.c.l.b16 %v344
          %v425 = vunpack.c.l.b16 %v345
          %v426 = vunpack.c.l.b16 %v346
          %v427 = vunpack.c.l.b16 %v347
          %v428 = vunpack.c.l.b16 %v348
          %v429 = vunpack.c.l.b16 %v349
          %v430 = vunpack.c.l.b16 %v350
          %v431 = vunpack.c.l.b16 %v351
          %v432 = vunpack.c.l.b16 %v352
          %v433 = vpack.c.b16 %v402, %v401
          %v434 = vpack.c.b16 %v404, %v403
          %v435 = vpack.c.b16 %v406, %v405
          %v436 = vpack.c.b16 %v408, %v407
          %v437 = vpack.c.b16 %v410, %v409
          %v438 = vpack.c.b16 %v412, %v411
          %v439 = vpack.c.b16 %v414, %v413
          %v440 = vpack.c.b16 %v416, %v415
          %v441 = vpack.c.b16 %v418, %v417
          %v442 = vpack.c.b16 %v420, %v419
          %v443 = vpack.c.b16 %v422, %v421
          %v444 = vpack.c.b16 %v424, %v423
          %v445 = vpack.c.b16 %v426, %v425
          %v446 = vpack.c.b16 %v428, %v427
          %v447 = vpack.c.b16 %v430, %v429
          %v448 = vpack.c.b16 %v432, %v431
          %v481 = vunpack.c.l.b16 %v353
          %v482 = vunpack.c.l.b16 %v354
          %v483 = vunpack.c.l.b16 %v355
          %v484 = vunpack.c.l.b16 %v356
          %v485 = vunpack.c.l.b16 %v357
          %v486 = vunpack.c.l.b16 %v358
          %v487 = vunpack.c.l.b16 %v359
          %v488 = vunpack.c.l.b16 %v360
          %v489 = vunpack.c.l.b16 %v361
          %v490 = vunpack.c.l.b16 %v362
          %v491 = vunpack.c.l.b16 %v363
          %v492 = vunpack.c.l.b16 %v364
          %v493 = vunpack.c.l.b16 %v365
          %v494 = vunpack.c.l.b16 %v366
          %v495 = vunpack.c.l.b16 %v367
          %v496 = vunpack.c.l.b16 %v368
          %v497 = vpack.c.b16 %v482, %v481
          %v498 = vpack.c.b16 %v484, %v483
          %v499 = vpack.c.b16 %v486, %v485
          %v500 = vpack.c.b16 %v488, %v487
          %v501 = vpack.c.b16 %v490, %v489
          %v502 = vpack.c.b16 %v492, %v491
          %v503 = vpack.c.b16 %v494, %v493
          %v504 = vpack.c.b16 %v496, %v495
          %513 = vmatprep.subr.bf16.mxu0 0
          %514 = vmatpush1.bf16.msra.mxu0 %v497
          %515 = vmatprep.subr.bf16.mxu0 0
          %516 = vmatpush1.bf16.msra.mxu0 %v498
          %517 = vmatprep.subr.bf16.mxu0 0
          %518 = vmatpush1.bf16.msra.mxu0 %v499
          %519 = vmatprep.subr.bf16.mxu0 0
          %520 = vmatpush1.bf16.msra.mxu0 %v500
          %521 = vmatprep.subr.bf16.mxu0 0
          %522 = vmatpush1.bf16.msra.mxu0 %v501
          %523 = vmatprep.subr.bf16.mxu0 0
          %524 = vmatpush1.bf16.msra.mxu0 %v502
          %525 = vmatprep.subr.bf16.mxu0 0
          %526 = vmatpush1.bf16.msra.mxu0 %v503
          %527 = vmatprep.subr.bf16.mxu0 0
          %528 = vmatpush1.bf16.msra.mxu0 %v504
          %529 = vmatprep.subr.bf16.mxu0 0
          %530 = vmatpush1.bf16.msra.mxu0 0
          %531 = vmatprep.subr.bf16.mxu0 0
          %532 = vmatpush1.bf16.msra.mxu0 0
          %533 = vmatprep.subr.bf16.mxu0 0
          %534 = vmatpush1.bf16.msra.mxu0 0
          %535 = vmatprep.subr.bf16.mxu0 0
          %536 = vmatpush1.bf16.msra.mxu0 0
          %537 = vmatprep.subr.bf16.mxu0 0
          %538 = vmatpush1.bf16.msra.mxu0 0
          %539 = vmatprep.subr.bf16.mxu0 0
          %540 = vmatpush1.bf16.msra.mxu0 0
          %541 = vmatprep.subr.bf16.mxu0 0
          %542 = vmatpush1.bf16.msra.mxu0 0
          %543 = vmatprep.subr.bf16.mxu0 0
          %544 = vmatpush1.bf16.msra.mxu0 0
          %545 = vmatprep.mubr.bf16.mxu0 0
          %546 = vmatmul.mubr.bf16.gmra.mrb[0].mxu0 %v433
          %v547 = vpop.f32.mrb[0].mxu0
          %v548 = vadd.f32 0.0, %v547
          %v549 = vpop.f32.mrb[0].mxu0
          %v550 = vpop.f32.mrb[0].mxu0
          %v551 = vadd.f32 0.0, %v550
          %v552 = vpop.f32.mrb[0].mxu0
          %553 = vmatprep.mubr.bf16.mxu0 0
          %554 = vmatmul.mubr.bf16.gmra.mrb[0].mxu0 %v434
          %v555 = vpop.f32.mrb[0].mxu0
          %v556 = vadd.f32 0.0, %v555
          %v557 = vpop.f32.mrb[0].mxu0
          %v558 = vpop.f32.mrb[0].mxu0
          %v559 = vadd.f32 0.0, %v558
          %v560 = vpop.f32.mrb[0].mxu0
          %561 = vmatprep.mubr.bf16.mxu0 0
          %562 = vmatmul.mubr.bf16.gmra.mrb[0].mxu0 %v435
          %v563 = vpop.f32.mrb[0].mxu0
          %v564 = vadd.f32 0.0, %v563
          %v565 = vpop.f32.mrb[0].mxu0
          %v566 = vpop.f32.mrb[0].mxu0
          %v567 = vadd.f32 0.0, %v566
          %v568 = vpop.f32.mrb[0].mxu0
          %569 = vmatprep.mubr.bf16.mxu0 0
          %570 = vmatmul.mubr.bf16.gmra.mrb[0].mxu0 %v436
          %v571 = vpop.f32.mrb[0].mxu0
          %v572 = vadd.f32 0.0, %v571
          %v573 = vpop.f32.mrb[0].mxu0
          %v574 = vpop.f32.mrb[0].mxu0
          %v575 = vadd.f32 0.0, %v574
          %v576 = vpop.f32.mrb[0].mxu0
          %577 = vmatprep.mubr.bf16.mxu0 0
          %578 = vmatmul.mubr.bf16.gmra.mrb[0].mxu0 %v437
          %v579 = vpop.f32.mrb[0].mxu0
          %v580 = vadd.f32 0.0, %v579
          %v581 = vpop.f32.mrb[0].mxu0
          %v582 = vpop.f32.mrb[0].mxu0
          %v583 = vadd.f32 0.0, %v582
          %v584 = vpop.f32.mrb[0].mxu0
          %585 = vmatprep.mubr.bf16.mxu0 0
          %586 = vmatmul.mubr.bf16.gmra.mrb[0].mxu0 %v438
          %v587 = vpop.f32.mrb[0].mxu0
          %v588 = vadd.f32 0.0, %v587
          %v589 = vpop.f32.mrb[0].mxu0
          %v590 = vpop.f32.mrb[0].mxu0
          %v591 = vadd.f32 0.0, %v590
          %v592 = vpop.f32.mrb[0].mxu0
          %593 = vmatprep.mubr.bf16.mxu0 0
          %594 = vmatmul.mubr.bf16.gmra.mrb[0].mxu0 %v439
          %v595 = vpop.f32.mrb[0].mxu0
          %v596 = vadd.f32 0.0, %v595
          %v597 = vpop.f32.mrb[0].mxu0
          %v598 = vpop.f32.mrb[0].mxu0
          %v599 = vadd.f32 0.0, %v598
          %v600 = vpop.f32.mrb[0].mxu0
          %601 = vmatprep.mubr.bf16.mxu0 0
          %602 = vmatmul.mubr.bf16.gmra.mrb[0].mxu0 %v440
          %v603 = vpop.f32.mrb[0].mxu0
          %v604 = vadd.f32 0.0, %v603
          %v605 = vpop.f32.mrb[0].mxu0
          %v606 = vpop.f32.mrb[0].mxu0
          %v607 = vadd.f32 0.0, %v606
          %v608 = vpop.f32.mrb[0].mxu0
          %609 = vmatprep.mubr.bf16.mxu0 0
          %610 = vmatmul.mubr.bf16.gmra.mrb[0].mxu0 %v441
          %v611 = vpop.f32.mrb[0].mxu0
          %v612 = vadd.f32 0.0, %v611
          %v613 = vpop.f32.mrb[0].mxu0
          %v614 = vpop.f32.mrb[0].mxu0
          %v615 = vadd.f32 0.0, %v614
          %v616 = vpop.f32.mrb[0].mxu0
          %617 = vmatprep.mubr.bf16.mxu0 0
          %618 = vmatmul.mubr.bf16.gmra.mrb[0].mxu0 %v442
          %v619 = vpop.f32.mrb[0].mxu0
          %v620 = vadd.f32 0.0, %v619
          %v621 = vpop.f32.mrb[0].mxu0
          %v622 = vpop.f32.mrb[0].mxu0
          %v623 = vadd.f32 0.0, %v622
          %v624 = vpop.f32.mrb[0].mxu0
          %625 = vmatprep.mubr.bf16.mxu0 0
          %626 = vmatmul.mubr.bf16.gmra.mrb[0].mxu0 %v443
          %v627 = vpop.f32.mrb[0].mxu0
          %v628 = vadd.f32 0.0, %v627
          %v629 = vpop.f32.mrb[0].mxu0
          %v630 = vpop.f32.mrb[0].mxu0
          %v631 = vadd.f32 0.0, %v630
          %v632 = vpop.f32.mrb[0].mxu0
          %633 = vmatprep.mubr.bf16.mxu0 0
          %634 = vmatmul.mubr.bf16.gmra.mrb[0].mxu0 %v444
          %v635 = vpop.f32.mrb[0].mxu0
          %v636 = vadd.f32 0.0, %v635
          %v637 = vpop.f32.mrb[0].mxu0
          %v638 = vpop.f32.mrb[0].mxu0
          %v639 = vadd.f32 0.0, %v638
          %v640 = vpop.f32.mrb[0].mxu0
          %641 = vmatprep.mubr.bf16.mxu0 0
          %642 = vmatmul.mubr.bf16.gmra.mrb[0].mxu0 %v445
          %v643 = vpop.f32.mrb[0].mxu0
          %v644 = vadd.f32 0.0, %v643
          %v645 = vpop.f32.mrb[0].mxu0
          %v646 = vpop.f32.mrb[0].mxu0
          %v647 = vadd.f32 0.0, %v646
          %v648 = vpop.f32.mrb[0].mxu0
          %649 = vmatprep.mubr.bf16.mxu0 0
          %650 = vmatmul.mubr.bf16.gmra.mrb[0].mxu0 %v446
          %v651 = vpop.f32.mrb[0].mxu0
          %v652 = vadd.f32 0.0, %v651
          %v653 = vpop.f32.mrb[0].mxu0
          %v654 = vpop.f32.mrb[0].mxu0
          %v655 = vadd.f32 0.0, %v654
          %v656 = vpop.f32.mrb[0].mxu0
          %657 = vmatprep.mubr.bf16.mxu0 0
          %658 = vmatmul.mubr.bf16.gmra.mrb[0].mxu0 %v447
          %v659 = vpop.f32.mrb[0].mxu0
          %v660 = vadd.f32 0.0, %v659
          %v661 = vpop.f32.mrb[0].mxu0
          %v662 = vpop.f32.mrb[0].mxu0
          %v663 = vadd.f32 0.0, %v662
          %v664 = vpop.f32.mrb[0].mxu0
          %665 = vmatprep.mubr.bf16.mxu0 0
          %666 = vmatmul.mubr.bf16.gmra.mrb[0].mxu0 %v448
          %v667 = vpop.f32.mrb[0].mxu0
          %v668 = vadd.f32 0.0, %v667
          %v669 = vpop.f32.mrb[0].mxu0
          %v670 = vpop.f32.mrb[0].mxu0
          %v671 = vadd.f32 0.0, %v670
          %v672 = vpop.f32.mrb[0].mxu0
          %673 = vdwg.mxu0
          %v674 = vpack.c.bf16 %v551, %v548
          %v675 = vpack.c.bf16 %v559, %v556
          %v676 = vpack.c.bf16 %v567, %v564
          %v677 = vpack.c.bf16 %v575, %v572
          %v678 = vpack.c.bf16 %v583, %v580
          %v679 = vpack.c.bf16 %v591, %v588
          %v680 = vpack.c.bf16 %v599, %v596
          %v681 = vpack.c.bf16 %v607, %v604
          %v682 = vpack.c.bf16 %v615, %v612
          %v683 = vpack.c.bf16 %v623, %v620
          %v684 = vpack.c.bf16 %v631, %v628
          %v685 = vpack.c.bf16 %v639, %v636
          %v686 = vpack.c.bf16 %v647, %v644
          %v687 = vpack.c.bf16 %v655, %v652
          %v688 = vpack.c.bf16 %v663, %v660
          %v689 = vpack.c.bf16 %v671, %v668
          %s690 = sshra.s32 %s316, 4
          %s691 = sand.u32 %s316, 15
          %s692 = smul.addr %s690, 8
          %s693 = scalar_lea.vmem [#allocation2], %s692
          %694 = vst [vmem:[%s693] sm:$0xff] %v674
          %695 = vst [vmem:[%s693 + $0x8] sm:$0xff] %v675
          %696 = vst [vmem:[%s693 + $0x10] sm:$0xff] %v676
          %697 = vst [vmem:[%s693 + $0x18] sm:$0xff] %v677
          %698 = vst [vmem:[%s693 + $0x20] sm:$0xff] %v678
          %699 = vst [vmem:[%s693 + $0x28] sm:$0xff] %v679
          %700 = vst [vmem:[%s693 + $0x30] sm:$0xff] %v680
          %701 = vst [vmem:[%s693 + $0x38] sm:$0xff] %v681
          %702 = vst [vmem:[%s693 + $0x40] sm:$0xff] %v682
          %703 = vst [vmem:[%s693 + $0x48] sm:$0xff] %v683
          %704 = vst [vmem:[%s693 + $0x50] sm:$0xff] %v684
          %705 = vst [vmem:[%s693 + $0x58] sm:$0xff] %v685
          %706 = vst [vmem:[%s693 + $0x60] sm:$0xff] %v686
          %707 = vst [vmem:[%s693 + $0x68] sm:$0xff] %v687
          %708 = vst [vmem:[%s693 + $0x70] sm:$0xff] %v688
          %709 = vst [vmem:[%s693 + $0x78] sm:$0xff] %v689
          %v710 = vld [vmem:[#allocation8] sm:$0x1]
          %v712 = vlaneseq
          %v713 = vshrl.u32 %v712, 7
          %v714 = vsub.s32 0, %v713
          %v715 = vrot.slane %v710, %v714
          %v717 = vadd.f32 %v548, %v715
          %v718 = vadd.f32 %v551, %v715
          %v719 = vadd.f32 %v556, %v715
          %v720 = vadd.f32 %v559, %v715
          %v721 = vadd.f32 %v564, %v715
          %v722 = vadd.f32 %v567, %v715
          %v723 = vadd.f32 %v572, %v715
          %v724 = vadd.f32 %v575, %v715
          %v725 = vadd.f32 %v580, %v715
          %v726 = vadd.f32 %v583, %v715
          %v727 = vadd.f32 %v588, %v715
          %v728 = vadd.f32 %v591, %v715
          %v729 = vadd.f32 %v596, %v715
          %v730 = vadd.f32 %v599, %v715
          %v731 = vadd.f32 %v604, %v715
          %v732 = vadd.f32 %v607, %v715
          %v733 = vadd.f32 %v612, %v715
          %v734 = vadd.f32 %v615, %v715
          %v735 = vadd.f32 %v620, %v715
          %v736 = vadd.f32 %v623, %v715
          %v737 = vadd.f32 %v628, %v715
          %v738 = vadd.f32 %v631, %v715
          %v739 = vadd.f32 %v636, %v715
          %v740 = vadd.f32 %v639, %v715
          %v741 = vadd.f32 %v644, %v715
          %v742 = vadd.f32 %v647, %v715
          %v743 = vadd.f32 %v652, %v715
          %v744 = vadd.f32 %v655, %v715
          %v745 = vadd.f32 %v660, %v715
          %v746 = vadd.f32 %v663, %v715
          %v747 = vadd.f32 %v668, %v715
          %v748 = vadd.f32 %v671, %v715
          %749 = vst [vmem:[%s307] sm:$0xff] %v717
          %750 = vst [vmem:[%s307 + $0x8] sm:$0xff] %v718
          %751 = vst [vmem:[%s307 + $0x10] sm:$0xff] %v719
          %752 = vst [vmem:[%s307 + $0x18] sm:$0xff] %v720
          %753 = vst [vmem:[%s307 + $0x20] sm:$0xff] %v721
          %754 = vst [vmem:[%s307 + $0x28] sm:$0xff] %v722
          %755 = vst [vmem:[%s307 + $0x30] sm:$0xff] %v723
          %756 = vst [vmem:[%s307 + $0x38] sm:$0xff] %v724
          %757 = vst [vmem:[%s307 + $0x40] sm:$0xff] %v725
          %758 = vst [vmem:[%s307 + $0x48] sm:$0xff] %v726
          %759 = vst [vmem:[%s307 + $0x50] sm:$0xff] %v727
          %760 = vst [vmem:[%s307 + $0x58] sm:$0xff] %v728
          %761 = vst [vmem:[%s307 + $0x60] sm:$0xff] %v729
          %762 = vst [vmem:[%s307 + $0x68] sm:$0xff] %v730
          %763 = vst [vmem:[%s307 + $0x70] sm:$0xff] %v731
          %764 = vst [vmem:[%s307 + $0x78] sm:$0xff] %v732
          %765 = vst [vmem:[%s307 + $0x80] sm:$0xff] %v733
          %766 = vst [vmem:[%s307 + $0x88] sm:$0xff] %v734
          %767 = vst [vmem:[%s307 + $0x90] sm:$0xff] %v735
          %768 = vst [vmem:[%s307 + $0x98] sm:$0xff] %v736
          %769 = vst [vmem:[%s307 + $0xa0] sm:$0xff] %v737
          %770 = vst [vmem:[%s307 + $0xa8] sm:$0xff] %v738
          %771 = vst [vmem:[%s307 + $0xb0] sm:$0xff] %v739
          %772 = vst [vmem:[%s307 + $0xb8] sm:$0xff] %v740
          %773 = vst [vmem:[%s307 + $0xc0] sm:$0xff] %v741
          %774 = vst [vmem:[%s307 + $0xc8] sm:$0xff] %v742
          %775 = vst [vmem:[%s307 + $0xd0] sm:$0xff] %v743
          %776 = vst [vmem:[%s307 + $0xd8] sm:$0xff] %v744
          %777 = vst [vmem:[%s307 + $0xe0] sm:$0xff] %v745
          %778 = vst [vmem:[%s307 + $0xe8] sm:$0xff] %v746
          %779 = vst [vmem:[%s307 + $0xf0] sm:$0xff] %v747
          %780 = vst [vmem:[%s307 + $0xf8] sm:$0xff] %v748
        $region56: #{dense_ngcn_forward.1} parent=35 // pred_fallthru
          _
        %p781 = scmp.gt.s32.totalorder %s29, 0
        // Predicated region
        $region57: #{dense_ngcn_forward.1} parent=35 // pred_check
          %p782 = pneg %p781
        $region58: #{dense_ngcn_forward.1} parent=35 // pred_check_branch
          %784 = sbr.rel (%p782) target = $region60
        $region59: #{dense_ngcn_forward.1} parent=35 // pred_region
          %p785 = scmp.lt.s32.totalorder %s29, 0
          %s786 = ssub.s32 0, %s29
          %s787 = scalar_select %p785, %s786, %s29
          %s788 = sand.u32 %s787, 1
          %s789 = ssub.s32 0, %s788
          %s790 = scalar_select %p785, %s789, %s788
          %p791 = scmp.ne.s32.totalorder %s790, 0
          %p792 = scmp.lt.s32.totalorder %s790, 0
          %p793 = pnand %p792, %p791
          %p794 = pneg %p793
          %s795 = sadd.s32 %s790, 2
          %s796 = scalar_select %p794, %s795, %s790
          %s797 = ssub.s32 1, %s796
          %s798 = smul.u32 %s797, 32
          %s799 = smul.addr %s798, 8
          %s800 = scalar_lea.vmem [#allocation2], %s799
          %v801 = vld [vmem:[%s800] sm:$0xff]
          %v802 = vld [vmem:[%s800 + $0x8] sm:$0xff]
          %v803 = vld [vmem:[%s800 + $0x10] sm:$0xff]
          %v804 = vld [vmem:[%s800 + $0x18] sm:$0xff]
          %v805 = vld [vmem:[%s800 + $0x20] sm:$0xff]
          %v806 = vld [vmem:[%s800 + $0x28] sm:$0xff]
          %v807 = vld [vmem:[%s800 + $0x30] sm:$0xff]
          %v808 = vld [vmem:[%s800 + $0x38] sm:$0xff]
          %v809 = vld [vmem:[%s800 + $0x40] sm:$0xff]
          %v810 = vld [vmem:[%s800 + $0x48] sm:$0xff]
          %v811 = vld [vmem:[%s800 + $0x50] sm:$0xff]
          %v812 = vld [vmem:[%s800 + $0x58] sm:$0xff]
          %v813 = vld [vmem:[%s800 + $0x60] sm:$0xff]
          %v814 = vld [vmem:[%s800 + $0x68] sm:$0xff]
          %v815 = vld [vmem:[%s800 + $0x70] sm:$0xff]
          %v816 = vld [vmem:[%s800 + $0x78] sm:$0xff]
          %v817 = vld [vmem:[%s800 + $0x80] sm:$0xff]
          %v818 = vld [vmem:[%s800 + $0x88] sm:$0xff]
          %v819 = vld [vmem:[%s800 + $0x90] sm:$0xff]
          %v820 = vld [vmem:[%s800 + $0x98] sm:$0xff]
          %v821 = vld [vmem:[%s800 + $0xa0] sm:$0xff]
          %v822 = vld [vmem:[%s800 + $0xa8] sm:$0xff]
          %v823 = vld [vmem:[%s800 + $0xb0] sm:$0xff]
          %v824 = vld [vmem:[%s800 + $0xb8] sm:$0xff]
          %v825 = vld [vmem:[%s800 + $0xc0] sm:$0xff]
          %v826 = vld [vmem:[%s800 + $0xc8] sm:$0xff]
          %v827 = vld [vmem:[%s800 + $0xd0] sm:$0xff]
          %v828 = vld [vmem:[%s800 + $0xd8] sm:$0xff]
          %v829 = vld [vmem:[%s800 + $0xe0] sm:$0xff]
          %v830 = vld [vmem:[%s800 + $0xe8] sm:$0xff]
          %v831 = vld [vmem:[%s800 + $0xf0] sm:$0xff]
          %v832 = vld [vmem:[%s800 + $0xf8] sm:$0xff]
          %v833 = vld [vmem:[%s278] sm:$0xff]
          %v834 = vld [vmem:[%s278 + $0x8] sm:$0xff]
          %v835 = vld [vmem:[%s278 + $0x10] sm:$0xff]
          %v836 = vld [vmem:[%s278 + $0x18] sm:$0xff]
          %v837 = vld [vmem:[%s278 + $0x20] sm:$0xff]
          %v838 = vld [vmem:[%s278 + $0x28] sm:$0xff]
          %v839 = vld [vmem:[%s278 + $0x30] sm:$0xff]
          %v840 = vld [vmem:[%s278 + $0x38] sm:$0xff]
          %v841 = vld [vmem:[%s278 + $0x40] sm:$0xff]
          %v842 = vld [vmem:[%s278 + $0x48] sm:$0xff]
          %v843 = vld [vmem:[%s278 + $0x50] sm:$0xff]
          %v844 = vld [vmem:[%s278 + $0x58] sm:$0xff]
          %v845 = vld [vmem:[%s278 + $0x60] sm:$0xff]
          %v846 = vld [vmem:[%s278 + $0x68] sm:$0xff]
          %v847 = vld [vmem:[%s278 + $0x70] sm:$0xff]
          %v848 = vld [vmem:[%s278 + $0x78] sm:$0xff]
          %v849 = vld [vmem:[%s278 + $0x80] sm:$0xff]
          %v850 = vld [vmem:[%s278 + $0x88] sm:$0xff]
          %v851 = vld [vmem:[%s278 + $0x90] sm:$0xff]
          %v852 = vld [vmem:[%s278 + $0x98] sm:$0xff]
          %v853 = vld [vmem:[%s278 + $0xa0] sm:$0xff]
          %v854 = vld [vmem:[%s278 + $0xa8] sm:$0xff]
          %v855 = vld [vmem:[%s278 + $0xb0] sm:$0xff]
          %v856 = vld [vmem:[%s278 + $0xb8] sm:$0xff]
          %v857 = vld [vmem:[%s278 + $0xc0] sm:$0xff]
          %v858 = vld [vmem:[%s278 + $0xc8] sm:$0xff]
          %v859 = vld [vmem:[%s278 + $0xd0] sm:$0xff]
          %v860 = vld [vmem:[%s278 + $0xd8] sm:$0xff]
          %v861 = vld [vmem:[%s278 + $0xe0] sm:$0xff]
          %v862 = vld [vmem:[%s278 + $0xe8] sm:$0xff]
          %v863 = vld [vmem:[%s278 + $0xf0] sm:$0xff]
          %v864 = vld [vmem:[%s278 + $0xf8] sm:$0xff]
          %v865 = vld [vmem:[%s278 + $0x100] sm:$0xff]
          %v866 = vld [vmem:[%s278 + $0x108] sm:$0xff]
          %v867 = vld [vmem:[%s278 + $0x110] sm:$0xff]
          %v868 = vld [vmem:[%s278 + $0x118] sm:$0xff]
          %v869 = vld [vmem:[%s278 + $0x120] sm:$0xff]
          %v870 = vld [vmem:[%s278 + $0x128] sm:$0xff]
          %v871 = vld [vmem:[%s278 + $0x130] sm:$0xff]
          %v872 = vld [vmem:[%s278 + $0x138] sm:$0xff]
          %v873 = vld [vmem:[%s278 + $0x140] sm:$0xff]
          %v874 = vld [vmem:[%s278 + $0x148] sm:$0xff]
          %v875 = vld [vmem:[%s278 + $0x150] sm:$0xff]
          %v876 = vld [vmem:[%s278 + $0x158] sm:$0xff]
          %v877 = vld [vmem:[%s278 + $0x160] sm:$0xff]
          %v878 = vld [vmem:[%s278 + $0x168] sm:$0xff]
          %v879 = vld [vmem:[%s278 + $0x170] sm:$0xff]
          %v880 = vld [vmem:[%s278 + $0x178] sm:$0xff]
          %v881 = vld [vmem:[%s278 + $0x180] sm:$0xff]
          %v882 = vld [vmem:[%s278 + $0x188] sm:$0xff]
          %v883 = vld [vmem:[%s278 + $0x190] sm:$0xff]
          %v884 = vld [vmem:[%s278 + $0x198] sm:$0xff]
          %v885 = vld [vmem:[%s278 + $0x1a0] sm:$0xff]
          %v886 = vld [vmem:[%s278 + $0x1a8] sm:$0xff]
          %v887 = vld [vmem:[%s278 + $0x1b0] sm:$0xff]
          %v888 = vld [vmem:[%s278 + $0x1b8] sm:$0xff]
          %v889 = vld [vmem:[%s278 + $0x1c0] sm:$0xff]
          %v890 = vld [vmem:[%s278 + $0x1c8] sm:$0xff]
          %v891 = vld [vmem:[%s278 + $0x1d0] sm:$0xff]
          %v892 = vld [vmem:[%s278 + $0x1d8] sm:$0xff]
          %v893 = vld [vmem:[%s278 + $0x1e0] sm:$0xff]
          %v894 = vld [vmem:[%s278 + $0x1e8] sm:$0xff]
          %v895 = vld [vmem:[%s278 + $0x1f0] sm:$0xff]
          %v896 = vld [vmem:[%s278 + $0x1f8] sm:$0xff]
          %v961 = vunpack.c.l.b16 %v833
          %v962 = vunpack.c.h.b16 %v833
          %v963 = vunpack.c.l.b16 %v834
          %v964 = vunpack.c.h.b16 %v834
          %v965 = vunpack.c.l.b16 %v835
          %v966 = vunpack.c.h.b16 %v835
          %v967 = vunpack.c.l.b16 %v836
          %v968 = vunpack.c.h.b16 %v836
          %v969 = vunpack.c.l.b16 %v837
          %v970 = vunpack.c.h.b16 %v837
          %v971 = vunpack.c.l.b16 %v838
          %v972 = vunpack.c.h.b16 %v838
          %v973 = vunpack.c.l.b16 %v839
          %v974 = vunpack.c.h.b16 %v839
          %v975 = vunpack.c.l.b16 %v840
          %v976 = vunpack.c.h.b16 %v840
          %v977 = vunpack.c.l.b16 %v841
          %v978 = vunpack.c.h.b16 %v841
          %v979 = vunpack.c.l.b16 %v842
          %v980 = vunpack.c.h.b16 %v842
          %v981 = vunpack.c.l.b16 %v843
          %v982 = vunpack.c.h.b16 %v843
          %v983 = vunpack.c.l.b16 %v844
          %v984 = vunpack.c.h.b16 %v844
          %v985 = vunpack.c.l.b16 %v845
          %v986 = vunpack.c.h.b16 %v845
          %v987 = vunpack.c.l.b16 %v846
          %v988 = vunpack.c.h.b16 %v846
          %v989 = vunpack.c.l.b16 %v847
          %v990 = vunpack.c.h.b16 %v847
          %v991 = vunpack.c.l.b16 %v848
          %v992 = vunpack.c.h.b16 %v848
          %v993 = vunpack.c.l.b16 %v849
          %v994 = vunpack.c.h.b16 %v849
          %v995 = vunpack.c.l.b16 %v850
          %v996 = vunpack.c.h.b16 %v850
          %v997 = vunpack.c.l.b16 %v851
          %v998 = vunpack.c.h.b16 %v851
          %v999 = vunpack.c.l.b16 %v852
          %v1000 = vunpack.c.h.b16 %v852
          %v1001 = vunpack.c.l.b16 %v853
          %v1002 = vunpack.c.h.b16 %v853
          %v1003 = vunpack.c.l.b16 %v854
          %v1004 = vunpack.c.h.b16 %v854
          %v1005 = vunpack.c.l.b16 %v855
          %v1006 = vunpack.c.h.b16 %v855
          %v1007 = vunpack.c.l.b16 %v856
          %v1008 = vunpack.c.h.b16 %v856
          %v1009 = vunpack.c.l.b16 %v857
          %v1010 = vunpack.c.h.b16 %v857
          %v1011 = vunpack.c.l.b16 %v858
          %v1012 = vunpack.c.h.b16 %v858
          %v1013 = vunpack.c.l.b16 %v859
          %v1014 = vunpack.c.h.b16 %v859
          %v1015 = vunpack.c.l.b16 %v860
          %v1016 = vunpack.c.h.b16 %v860
          %v1017 = vunpack.c.l.b16 %v861
          %v1018 = vunpack.c.h.b16 %v861
          %v1019 = vunpack.c.l.b16 %v862
          %v1020 = vunpack.c.h.b16 %v862
          %v1021 = vunpack.c.l.b16 %v863
          %v1022 = vunpack.c.h.b16 %v863
          %v1023 = vunpack.c.l.b16 %v864
          %v1024 = vunpack.c.h.b16 %v864
          %v1025 = vunpack.c.l.b16 %v865
          %v1026 = vunpack.c.h.b16 %v865
          %v1027 = vunpack.c.l.b16 %v866
          %v1028 = vunpack.c.h.b16 %v866
          %v1029 = vunpack.c.l.b16 %v867
          %v1030 = vunpack.c.h.b16 %v867
          %v1031 = vunpack.c.l.b16 %v868
          %v1032 = vunpack.c.h.b16 %v868
          %v1033 = vunpack.c.l.b16 %v869
          %v1034 = vunpack.c.h.b16 %v869
          %v1035 = vunpack.c.l.b16 %v870
          %v1036 = vunpack.c.h.b16 %v870
          %v1037 = vunpack.c.l.b16 %v871
          %v1038 = vunpack.c.h.b16 %v871
          %v1039 = vunpack.c.l.b16 %v872
          %v1040 = vunpack.c.h.b16 %v872
          %v1041 = vunpack.c.l.b16 %v873
          %v1042 = vunpack.c.h.b16 %v873
          %v1043 = vunpack.c.l.b16 %v874
          %v1044 = vunpack.c.h.b16 %v874
          %v1045 = vunpack.c.l.b16 %v875
          %v1046 = vunpack.c.h.b16 %v875
          %v1047 = vunpack.c.l.b16 %v876
          %v1048 = vunpack.c.h.b16 %v876
          %v1049 = vunpack.c.l.b16 %v877
          %v1050 = vunpack.c.h.b16 %v877
          %v1051 = vunpack.c.l.b16 %v878
          %v1052 = vunpack.c.h.b16 %v878
          %v1053 = vunpack.c.l.b16 %v879
          %v1054 = vunpack.c.h.b16 %v879
          %v1055 = vunpack.c.l.b16 %v880
          %v1056 = vunpack.c.h.b16 %v880
          %v1057 = vunpack.c.l.b16 %v881
          %v1058 = vunpack.c.h.b16 %v881
          %v1059 = vunpack.c.l.b16 %v882
          %v1060 = vunpack.c.h.b16 %v882
          %v1061 = vunpack.c.l.b16 %v883
          %v1062 = vunpack.c.h.b16 %v883
          %v1063 = vunpack.c.l.b16 %v884
          %v1064 = vunpack.c.h.b16 %v884
          %v1065 = vunpack.c.l.b16 %v885
          %v1066 = vunpack.c.h.b16 %v885
          %v1067 = vunpack.c.l.b16 %v886
          %v1068 = vunpack.c.h.b16 %v886
          %v1069 = vunpack.c.l.b16 %v887
          %v1070 = vunpack.c.h.b16 %v887
          %v1071 = vunpack.c.l.b16 %v888
          %v1072 = vunpack.c.h.b16 %v888
          %v1073 = vunpack.c.l.b16 %v889
          %v1074 = vunpack.c.h.b16 %v889
          %v1075 = vunpack.c.l.b16 %v890
          %v1076 = vunpack.c.h.b16 %v890
          %v1077 = vunpack.c.l.b16 %v891
          %v1078 = vunpack.c.h.b16 %v891
          %v1079 = vunpack.c.l.b16 %v892
          %v1080 = vunpack.c.h.b16 %v892
          %v1081 = vunpack.c.l.b16 %v893
          %v1082 = vunpack.c.h.b16 %v893
          %v1083 = vunpack.c.l.b16 %v894
          %v1084 = vunpack.c.h.b16 %v894
          %v1085 = vunpack.c.l.b16 %v895
          %v1086 = vunpack.c.h.b16 %v895
          %v1087 = vunpack.c.l.b16 %v896
          %v1088 = vunpack.c.h.b16 %v896
          %v1089 = vpack.c.b16 %v965, %v961
          %v1090 = vpack.c.b16 %v966, %v962
          %v1091 = vpack.c.b16 %v967, %v963
          %v1092 = vpack.c.b16 %v968, %v964
          %v1093 = vpack.c.b16 %v973, %v969
          %v1094 = vpack.c.b16 %v974, %v970
          %v1095 = vpack.c.b16 %v975, %v971
          %v1096 = vpack.c.b16 %v976, %v972
          %v1097 = vpack.c.b16 %v981, %v977
          %v1098 = vpack.c.b16 %v982, %v978
          %v1099 = vpack.c.b16 %v983, %v979
          %v1100 = vpack.c.b16 %v984, %v980
          %v1101 = vpack.c.b16 %v989, %v985
          %v1102 = vpack.c.b16 %v990, %v986
          %v1103 = vpack.c.b16 %v991, %v987
          %v1104 = vpack.c.b16 %v992, %v988
          %v1105 = vpack.c.b16 %v997, %v993
          %v1106 = vpack.c.b16 %v998, %v994
          %v1107 = vpack.c.b16 %v999, %v995
          %v1108 = vpack.c.b16 %v1000, %v996
          %v1109 = vpack.c.b16 %v1005, %v1001
          %v1110 = vpack.c.b16 %v1006, %v1002
          %v1111 = vpack.c.b16 %v1007, %v1003
          %v1112 = vpack.c.b16 %v1008, %v1004
          %v1113 = vpack.c.b16 %v1013, %v1009
          %v1114 = vpack.c.b16 %v1014, %v1010
          %v1115 = vpack.c.b16 %v1015, %v1011
          %v1116 = vpack.c.b16 %v1016, %v1012
          %v1117 = vpack.c.b16 %v1021, %v1017
          %v1118 = vpack.c.b16 %v1022, %v1018
          %v1119 = vpack.c.b16 %v1023, %v1019
          %v1120 = vpack.c.b16 %v1024, %v1020
          %v1121 = vpack.c.b16 %v1029, %v1025
          %v1122 = vpack.c.b16 %v1030, %v1026
          %v1123 = vpack.c.b16 %v1031, %v1027
          %v1124 = vpack.c.b16 %v1032, %v1028
          %v1125 = vpack.c.b16 %v1037, %v1033
          %v1126 = vpack.c.b16 %v1038, %v1034
          %v1127 = vpack.c.b16 %v1039, %v1035
          %v1128 = vpack.c.b16 %v1040, %v1036
          %v1129 = vpack.c.b16 %v1045, %v1041
          %v1130 = vpack.c.b16 %v1046, %v1042
          %v1131 = vpack.c.b16 %v1047, %v1043
          %v1132 = vpack.c.b16 %v1048, %v1044
          %v1133 = vpack.c.b16 %v1053, %v1049
          %v1134 = vpack.c.b16 %v1054, %v1050
          %v1135 = vpack.c.b16 %v1055, %v1051
          %v1136 = vpack.c.b16 %v1056, %v1052
          %v1137 = vpack.c.b16 %v1061, %v1057
          %v1138 = vpack.c.b16 %v1062, %v1058
          %v1139 = vpack.c.b16 %v1063, %v1059
          %v1140 = vpack.c.b16 %v1064, %v1060
          %v1141 = vpack.c.b16 %v1069, %v1065
          %v1142 = vpack.c.b16 %v1070, %v1066
          %v1143 = vpack.c.b16 %v1071, %v1067
          %v1144 = vpack.c.b16 %v1072, %v1068
          %v1145 = vpack.c.b16 %v1077, %v1073
          %v1146 = vpack.c.b16 %v1078, %v1074
          %v1147 = vpack.c.b16 %v1079, %v1075
          %v1148 = vpack.c.b16 %v1080, %v1076
          %v1149 = vpack.c.b16 %v1085, %v1081
          %v1150 = vpack.c.b16 %v1086, %v1082
          %v1151 = vpack.c.b16 %v1087, %v1083
          %v1152 = vpack.c.b16 %v1088, %v1084
          %1217 = vmatprep.subr.bf16.mxu0 0
          %1218 = vmatpush1.bf16.msra.mxu0 %v801
          %1219 = vmatprep.subr.bf16.mxu0 0
          %1220 = vmatpush1.bf16.msra.mxu0 %v802
          %1221 = vmatprep.subr.bf16.mxu0 0
          %1222 = vmatpush1.bf16.msra.mxu0 %v803
          %1223 = vmatprep.subr.bf16.mxu0 0
          %1224 = vmatpush1.bf16.msra.mxu0 %v804
          %1225 = vmatprep.subr.bf16.mxu0 0
          %1226 = vmatpush1.bf16.msra.mxu0 %v805
          %1227 = vmatprep.subr.bf16.mxu0 0
          %1228 = vmatpush1.bf16.msra.mxu0 %v806
          %1229 = vmatprep.subr.bf16.mxu0 0
          %1230 = vmatpush1.bf16.msra.mxu0 %v807
          %1231 = vmatprep.subr.bf16.mxu0 0
          %1232 = vmatpush1.bf16.msra.mxu0 %v808
          %1233 = vmatprep.subr.bf16.mxu0 0
          %1234 = vmatpush1.bf16.msra.mxu0 %v809
          %1235 = vmatprep.subr.bf16.mxu0 0
          %1236 = vmatpush1.bf16.msra.mxu0 %v810
          %1237 = vmatprep.subr.bf16.mxu0 0
          %1238 = vmatpush1.bf16.msra.mxu0 %v811
          %1239 = vmatprep.subr.bf16.mxu0 0
          %1240 = vmatpush1.bf16.msra.mxu0 %v812
          %1241 = vmatprep.subr.bf16.mxu0 0
          %1242 = vmatpush1.bf16.msra.mxu0 %v813
          %1243 = vmatprep.subr.bf16.mxu0 0
          %1244 = vmatpush1.bf16.msra.mxu0 %v814
          %1245 = vmatprep.subr.bf16.mxu0 0
          %1246 = vmatpush1.bf16.msra.mxu0 %v815
          %1247 = vmatprep.subr.bf16.mxu0 0
          %1248 = vmatpush1.bf16.msra.mxu0 %v816
          %1249 = vmatprep.mubr.bf16.mxu0 %v1090
          %1250 = vmatmul.mubr.bf16.gmra.mrb[0].mxu0 %v1089
          %v1251 = vpop.f32.mrb[0].mxu0
          %v1252 = vadd.f32 0.0, %v1251
          %v1253 = vpop.f32.mrb[0].mxu0
          %v1254 = vpop.f32.mrb[0].mxu0
          %v1255 = vadd.f32 0.0, %v1254
          %v1256 = vpop.f32.mrb[0].mxu0
          %1257 = vmatprep.mubr.bf16.mxu0 %v1094
          %1258 = vmatmul.mubr.bf16.gmra.mrb[0].mxu0 %v1093
          %v1259 = vpop.f32.mrb[0].mxu0
          %v1260 = vadd.f32 0.0, %v1259
          %v1261 = vpop.f32.mrb[0].mxu0
          %v1262 = vpop.f32.mrb[0].mxu0
          %v1263 = vadd.f32 0.0, %v1262
          %v1264 = vpop.f32.mrb[0].mxu0
          %1265 = vmatprep.mubr.bf16.mxu0 %v1098
          %1266 = vmatmul.mubr.bf16.gmra.mrb[0].mxu0 %v1097
          %v1267 = vpop.f32.mrb[0].mxu0
          %v1268 = vadd.f32 0.0, %v1267
          %v1269 = vpop.f32.mrb[0].mxu0
          %v1270 = vpop.f32.mrb[0].mxu0
          %v1271 = vadd.f32 0.0, %v1270
          %v1272 = vpop.f32.mrb[0].mxu0
          %1273 = vmatprep.mubr.bf16.mxu0 %v1102
          %1274 = vmatmul.mubr.bf16.gmra.mrb[0].mxu0 %v1101
          %v1275 = vpop.f32.mrb[0].mxu0
          %v1276 = vadd.f32 0.0, %v1275
          %v1277 = vpop.f32.mrb[0].mxu0
          %v1278 = vpop.f32.mrb[0].mxu0
          %v1279 = vadd.f32 0.0, %v1278
          %v1280 = vpop.f32.mrb[0].mxu0
          %1281 = vmatprep.mubr.bf16.mxu0 %v1106
          %1282 = vmatmul.mubr.bf16.gmra.mrb[0].mxu0 %v1105
          %v1283 = vpop.f32.mrb[0].mxu0
          %v1284 = vadd.f32 0.0, %v1283
          %v1285 = vpop.f32.mrb[0].mxu0
          %v1286 = vpop.f32.mrb[0].mxu0
          %v1287 = vadd.f32 0.0, %v1286
          %v1288 = vpop.f32.mrb[0].mxu0
          %1289 = vmatprep.mubr.bf16.mxu0 %v1110
          %1290 = vmatmul.mubr.bf16.gmra.mrb[0].mxu0 %v1109
          %v1291 = vpop.f32.mrb[0].mxu0
          %v1292 = vadd.f32 0.0, %v1291
          %v1293 = vpop.f32.mrb[0].mxu0
          %v1294 = vpop.f32.mrb[0].mxu0
          %v1295 = vadd.f32 0.0, %v1294
          %v1296 = vpop.f32.mrb[0].mxu0
          %1297 = vmatprep.mubr.bf16.mxu0 %v1114
          %1298 = vmatmul.mubr.bf16.gmra.mrb[0].mxu0 %v1113
          %v1299 = vpop.f32.mrb[0].mxu0
          %v1300 = vadd.f32 0.0, %v1299
          %v1301 = vpop.f32.mrb[0].mxu0
          %v1302 = vpop.f32.mrb[0].mxu0
          %v1303 = vadd.f32 0.0, %v1302
          %v1304 = vpop.f32.mrb[0].mxu0
          %1305 = vmatprep.mubr.bf16.mxu0 %v1118
          %1306 = vmatmul.mubr.bf16.gmra.mrb[0].mxu0 %v1117
          %v1307 = vpop.f32.mrb[0].mxu0
          %v1308 = vadd.f32 0.0, %v1307
          %v1309 = vpop.f32.mrb[0].mxu0
          %v1310 = vpop.f32.mrb[0].mxu0
          %v1311 = vadd.f32 0.0, %v1310
          %v1312 = vpop.f32.mrb[0].mxu0
          %1313 = vmatprep.mubr.bf16.mxu0 %v1122
          %1314 = vmatmul.mubr.bf16.gmra.mrb[0].mxu0 %v1121
          %v1315 = vpop.f32.mrb[0].mxu0
          %v1316 = vadd.f32 0.0, %v1315
          %v1317 = vpop.f32.mrb[0].mxu0
          %v1318 = vpop.f32.mrb[0].mxu0
          %v1319 = vadd.f32 0.0, %v1318
          %v1320 = vpop.f32.mrb[0].mxu0
          %1321 = vmatprep.mubr.bf16.mxu0 %v1126
          %1322 = vmatmul.mubr.bf16.gmra.mrb[0].mxu0 %v1125
          %v1323 = vpop.f32.mrb[0].mxu0
          %v1324 = vadd.f32 0.0, %v1323
          %v1325 = vpop.f32.mrb[0].mxu0
          %v1326 = vpop.f32.mrb[0].mxu0
          %v1327 = vadd.f32 0.0, %v1326
          %v1328 = vpop.f32.mrb[0].mxu0
          %1329 = vmatprep.mubr.bf16.mxu0 %v1130
          %1330 = vmatmul.mubr.bf16.gmra.mrb[0].mxu0 %v1129
          %v1331 = vpop.f32.mrb[0].mxu0
          %v1332 = vadd.f32 0.0, %v1331
          %v1333 = vpop.f32.mrb[0].mxu0
          %v1334 = vpop.f32.mrb[0].mxu0
          %v1335 = vadd.f32 0.0, %v1334
          %v1336 = vpop.f32.mrb[0].mxu0
          %1337 = vmatprep.mubr.bf16.mxu0 %v1134
          %1338 = vmatmul.mubr.bf16.gmra.mrb[0].mxu0 %v1133
          %v1339 = vpop.f32.mrb[0].mxu0
          %v1340 = vadd.f32 0.0, %v1339
          %v1341 = vpop.f32.mrb[0].mxu0
          %v1342 = vpop.f32.mrb[0].mxu0
          %v1343 = vadd.f32 0.0, %v1342
          %v1344 = vpop.f32.mrb[0].mxu0
          %1345 = vmatprep.mubr.bf16.mxu0 %v1138
          %1346 = vmatmul.mubr.bf16.gmra.mrb[0].mxu0 %v1137
          %v1347 = vpop.f32.mrb[0].mxu0
          %v1348 = vadd.f32 0.0, %v1347
          %v1349 = vpop.f32.mrb[0].mxu0
          %v1350 = vpop.f32.mrb[0].mxu0
          %v1351 = vadd.f32 0.0, %v1350
          %v1352 = vpop.f32.mrb[0].mxu0
          %1353 = vmatprep.mubr.bf16.mxu0 %v1142
          %1354 = vmatmul.mubr.bf16.gmra.mrb[0].mxu0 %v1141
          %v1355 = vpop.f32.mrb[0].mxu0
          %v1356 = vadd.f32 0.0, %v1355
          %v1357 = vpop.f32.mrb[0].mxu0
          %v1358 = vpop.f32.mrb[0].mxu0
          %v1359 = vadd.f32 0.0, %v1358
          %v1360 = vpop.f32.mrb[0].mxu0
          %1361 = vmatprep.mubr.bf16.mxu0 %v1146
          %1362 = vmatmul.mubr.bf16.gmra.mrb[0].mxu0 %v1145
          %v1363 = vpop.f32.mrb[0].mxu0
          %v1364 = vadd.f32 0.0, %v1363
          %v1365 = vpop.f32.mrb[0].mxu0
          %v1366 = vpop.f32.mrb[0].mxu0
          %v1367 = vadd.f32 0.0, %v1366
          %v1368 = vpop.f32.mrb[0].mxu0
          %1369 = vmatprep.mubr.bf16.mxu0 %v1150
          %1370 = vmatmul.mubr.bf16.gmra.mrb[0].mxu0 %v1149
          %v1371 = vpop.f32.mrb[0].mxu0
          %v1372 = vadd.f32 0.0, %v1371
          %v1373 = vpop.f32.mrb[0].mxu0
          %v1374 = vpop.f32.mrb[0].mxu0
          %v1375 = vadd.f32 0.0, %v1374
          %v1376 = vpop.f32.mrb[0].mxu0
          %1377 = vdwg.mxu0
          %1378 = vmatprep.subr.bf16.mxu0 0
          %1379 = vmatpush1.bf16.msra.mxu0 %v817
          %1380 = vmatprep.subr.bf16.mxu0 0
          %1381 = vmatpush1.bf16.msra.mxu0 %v818
          %1382 = vmatprep.subr.bf16.mxu0 0
          %1383 = vmatpush1.bf16.msra.mxu0 %v819
          %1384 = vmatprep.subr.bf16.mxu0 0
          %1385 = vmatpush1.bf16.msra.mxu0 %v820
          %1386 = vmatprep.subr.bf16.mxu0 0
          %1387 = vmatpush1.bf16.msra.mxu0 %v821
          %1388 = vmatprep.subr.bf16.mxu0 0
          %1389 = vmatpush1.bf16.msra.mxu0 %v822
          %1390 = vmatprep.subr.bf16.mxu0 0
          %1391 = vmatpush1.bf16.msra.mxu0 %v823
          %1392 = vmatprep.subr.bf16.mxu0 0
          %1393 = vmatpush1.bf16.msra.mxu0 %v824
          %1394 = vmatprep.subr.bf16.mxu0 0
          %1395 = vmatpush1.bf16.msra.mxu0 %v825
          %1396 = vmatprep.subr.bf16.mxu0 0
          %1397 = vmatpush1.bf16.msra.mxu0 %v826
          %1398 = vmatprep.subr.bf16.mxu0 0
          %1399 = vmatpush1.bf16.msra.mxu0 %v827
          %1400 = vmatprep.subr.bf16.mxu0 0
          %1401 = vmatpush1.bf16.msra.mxu0 %v828
          %1402 = vmatprep.subr.bf16.mxu0 0
          %1403 = vmatpush1.bf16.msra.mxu0 %v829
          %1404 = vmatprep.subr.bf16.mxu0 0
          %1405 = vmatpush1.bf16.msra.mxu0 %v830
          %1406 = vmatprep.subr.bf16.mxu0 0
          %1407 = vmatpush1.bf16.msra.mxu0 %v831
          %1408 = vmatprep.subr.bf16.mxu0 0
          %1409 = vmatpush1.bf16.msra.mxu0 %v832
          %1410 = vmatprep.mubr.bf16.mxu0 %v1092
          %1411 = vmatmul.mubr.bf16.gmra.mrb[0].mxu0 %v1091
          %v1412 = vpop.f32.mrb[0].mxu0
          %v1413 = vadd.f32 %v1252, %v1412
          %v1414 = vpop.f32.mrb[0].mxu0
          %v1415 = vpop.f32.mrb[0].mxu0
          %v1416 = vadd.f32 %v1255, %v1415
          %v1417 = vpop.f32.mrb[0].mxu0
          %1418 = vmatprep.mubr.bf16.mxu0 %v1096
          %1419 = vmatmul.mubr.bf16.gmra.mrb[0].mxu0 %v1095
          %v1420 = vpop.f32.mrb[0].mxu0
          %v1421 = vadd.f32 %v1260, %v1420
          %v1422 = vpop.f32.mrb[0].mxu0
          %v1423 = vpop.f32.mrb[0].mxu0
          %v1424 = vadd.f32 %v1263, %v1423
          %v1425 = vpop.f32.mrb[0].mxu0
          %1426 = vmatprep.mubr.bf16.mxu0 %v1100
          %1427 = vmatmul.mubr.bf16.gmra.mrb[0].mxu0 %v1099
          %v1428 = vpop.f32.mrb[0].mxu0
          %v1429 = vadd.f32 %v1268, %v1428
          %v1430 = vpop.f32.mrb[0].mxu0
          %v1431 = vpop.f32.mrb[0].mxu0
          %v1432 = vadd.f32 %v1271, %v1431
          %v1433 = vpop.f32.mrb[0].mxu0
          %1434 = vmatprep.mubr.bf16.mxu0 %v1104
          %1435 = vmatmul.mubr.bf16.gmra.mrb[0].mxu0 %v1103
          %v1436 = vpop.f32.mrb[0].mxu0
          %v1437 = vadd.f32 %v1276, %v1436
          %v1438 = vpop.f32.mrb[0].mxu0
          %v1439 = vpop.f32.mrb[0].mxu0
          %v1440 = vadd.f32 %v1279, %v1439
          %v1441 = vpop.f32.mrb[0].mxu0
          %1442 = vmatprep.mubr.bf16.mxu0 %v1108
          %1443 = vmatmul.mubr.bf16.gmra.mrb[0].mxu0 %v1107
          %v1444 = vpop.f32.mrb[0].mxu0
          %v1445 = vadd.f32 %v1284, %v1444
          %v1446 = vpop.f32.mrb[0].mxu0
          %v1447 = vpop.f32.mrb[0].mxu0
          %v1448 = vadd.f32 %v1287, %v1447
          %v1449 = vpop.f32.mrb[0].mxu0
          %1450 = vmatprep.mubr.bf16.mxu0 %v1112
          %1451 = vmatmul.mubr.bf16.gmra.mrb[0].mxu0 %v1111
          %v1452 = vpop.f32.mrb[0].mxu0
          %v1453 = vadd.f32 %v1292, %v1452
          %v1454 = vpop.f32.mrb[0].mxu0
          %v1455 = vpop.f32.mrb[0].mxu0
          %v1456 = vadd.f32 %v1295, %v1455
          %v1457 = vpop.f32.mrb[0].mxu0
          %1458 = vmatprep.mubr.bf16.mxu0 %v1116
          %1459 = vmatmul.mubr.bf16.gmra.mrb[0].mxu0 %v1115
          %v1460 = vpop.f32.mrb[0].mxu0
          %v1461 = vadd.f32 %v1300, %v1460
          %v1462 = vpop.f32.mrb[0].mxu0
          %v1463 = vpop.f32.mrb[0].mxu0
          %v1464 = vadd.f32 %v1303, %v1463
          %v1465 = vpop.f32.mrb[0].mxu0
          %1466 = vmatprep.mubr.bf16.mxu0 %v1120
          %1467 = vmatmul.mubr.bf16.gmra.mrb[0].mxu0 %v1119
          %v1468 = vpop.f32.mrb[0].mxu0
          %v1469 = vadd.f32 %v1308, %v1468
          %v1470 = vpop.f32.mrb[0].mxu0
          %v1471 = vpop.f32.mrb[0].mxu0
          %v1472 = vadd.f32 %v1311, %v1471
          %v1473 = vpop.f32.mrb[0].mxu0
          %1474 = vmatprep.mubr.bf16.mxu0 %v1124
          %1475 = vmatmul.mubr.bf16.gmra.mrb[0].mxu0 %v1123
          %v1476 = vpop.f32.mrb[0].mxu0
          %v1477 = vadd.f32 %v1316, %v1476
          %v1478 = vpop.f32.mrb[0].mxu0
          %v1479 = vpop.f32.mrb[0].mxu0
          %v1480 = vadd.f32 %v1319, %v1479
          %v1481 = vpop.f32.mrb[0].mxu0
          %1482 = vmatprep.mubr.bf16.mxu0 %v1128
          %1483 = vmatmul.mubr.bf16.gmra.mrb[0].mxu0 %v1127
          %v1484 = vpop.f32.mrb[0].mxu0
          %v1485 = vadd.f32 %v1324, %v1484
          %v1486 = vpop.f32.mrb[0].mxu0
          %v1487 = vpop.f32.mrb[0].mxu0
          %v1488 = vadd.f32 %v1327, %v1487
          %v1489 = vpop.f32.mrb[0].mxu0
          %1490 = vmatprep.mubr.bf16.mxu0 %v1132
          %1491 = vmatmul.mubr.bf16.gmra.mrb[0].mxu0 %v1131
          %v1492 = vpop.f32.mrb[0].mxu0
          %v1493 = vadd.f32 %v1332, %v1492
          %v1494 = vpop.f32.mrb[0].mxu0
          %v1495 = vpop.f32.mrb[0].mxu0
          %v1496 = vadd.f32 %v1335, %v1495
          %v1497 = vpop.f32.mrb[0].mxu0
          %1498 = vmatprep.mubr.bf16.mxu0 %v1136
          %1499 = vmatmul.mubr.bf16.gmra.mrb[0].mxu0 %v1135
          %v1500 = vpop.f32.mrb[0].mxu0
          %v1501 = vadd.f32 %v1340, %v1500
          %v1502 = vpop.f32.mrb[0].mxu0
          %v1503 = vpop.f32.mrb[0].mxu0
          %v1504 = vadd.f32 %v1343, %v1503
          %v1505 = vpop.f32.mrb[0].mxu0
          %1506 = vmatprep.mubr.bf16.mxu0 %v1140
          %1507 = vmatmul.mubr.bf16.gmra.mrb[0].mxu0 %v1139
          %v1508 = vpop.f32.mrb[0].mxu0
          %v1509 = vadd.f32 %v1348, %v1508
          %v1510 = vpop.f32.mrb[0].mxu0
          %v1511 = vpop.f32.mrb[0].mxu0
          %v1512 = vadd.f32 %v1351, %v1511
          %v1513 = vpop.f32.mrb[0].mxu0
          %1514 = vmatprep.mubr.bf16.mxu0 %v1144
          %1515 = vmatmul.mubr.bf16.gmra.mrb[0].mxu0 %v1143
          %v1516 = vpop.f32.mrb[0].mxu0
          %v1517 = vadd.f32 %v1356, %v1516
          %v1518 = vpop.f32.mrb[0].mxu0
          %v1519 = vpop.f32.mrb[0].mxu0
          %v1520 = vadd.f32 %v1359, %v1519
          %v1521 = vpop.f32.mrb[0].mxu0
          %1522 = vmatprep.mubr.bf16.mxu0 %v1148
          %1523 = vmatmul.mubr.bf16.gmra.mrb[0].mxu0 %v1147
          %v1524 = vpop.f32.mrb[0].mxu0
          %v1525 = vadd.f32 %v1364, %v1524
          %v1526 = vpop.f32.mrb[0].mxu0
          %v1527 = vpop.f32.mrb[0].mxu0
          %v1528 = vadd.f32 %v1367, %v1527
          %v1529 = vpop.f32.mrb[0].mxu0
          %1530 = vmatprep.mubr.bf16.mxu0 %v1152
          %1531 = vmatmul.mubr.bf16.gmra.mrb[0].mxu0 %v1151
          %v1532 = vpop.f32.mrb[0].mxu0
          %v1533 = vadd.f32 %v1372, %v1532
          %v1534 = vpop.f32.mrb[0].mxu0
          %v1535 = vpop.f32.mrb[0].mxu0
          %v1536 = vadd.f32 %v1375, %v1535
          %v1537 = vpop.f32.mrb[0].mxu0
          %1538 = vdwg.mxu0
          %v1539 = vpack.c.bf16 %v1416, %v1413
          %v1540 = vpack.c.bf16 %v1424, %v1421
          %v1541 = vpack.c.bf16 %v1432, %v1429
          %v1542 = vpack.c.bf16 %v1440, %v1437
          %v1543 = vpack.c.bf16 %v1448, %v1445
          %v1544 = vpack.c.bf16 %v1456, %v1453
          %v1545 = vpack.c.bf16 %v1464, %v1461
          %v1546 = vpack.c.bf16 %v1472, %v1469
          %v1547 = vpack.c.bf16 %v1480, %v1477
          %v1548 = vpack.c.bf16 %v1488, %v1485
          %v1549 = vpack.c.bf16 %v1496, %v1493
          %v1550 = vpack.c.bf16 %v1504, %v1501
          %v1551 = vpack.c.bf16 %v1512, %v1509
          %v1552 = vpack.c.bf16 %v1520, %v1517
          %v1553 = vpack.c.bf16 %v1528, %v1525
          %v1554 = vpack.c.bf16 %v1536, %v1533
          %s1555 = sshra.s32 %s316, 4
          %s1556 = sand.u32 %s316, 15
          %s1557 = smul.u32 %s796, 32
          %s1558 = sadd.s32 %s1555, %s1557
          %s1559 = smul.addr %s1558, 8
          %s1560 = scalar_lea.vmem [#allocation2], %s1559
          %1561 = vst [vmem:[%s1560] sm:$0xff] %v1539
          %1562 = vst [vmem:[%s1560 + $0x8] sm:$0xff] %v1540
          %1563 = vst [vmem:[%s1560 + $0x10] sm:$0xff] %v1541
          %1564 = vst [vmem:[%s1560 + $0x18] sm:$0xff] %v1542
          %1565 = vst [vmem:[%s1560 + $0x20] sm:$0xff] %v1543
          %1566 = vst [vmem:[%s1560 + $0x28] sm:$0xff] %v1544
          %1567 = vst [vmem:[%s1560 + $0x30] sm:$0xff] %v1545
          %1568 = vst [vmem:[%s1560 + $0x38] sm:$0xff] %v1546
          %1569 = vst [vmem:[%s1560 + $0x40] sm:$0xff] %v1547
          %1570 = vst [vmem:[%s1560 + $0x48] sm:$0xff] %v1548
          %1571 = vst [vmem:[%s1560 + $0x50] sm:$0xff] %v1549
          %1572 = vst [vmem:[%s1560 + $0x58] sm:$0xff] %v1550
          %1573 = vst [vmem:[%s1560 + $0x60] sm:$0xff] %v1551
          %1574 = vst [vmem:[%s1560 + $0x68] sm:$0xff] %v1552
          %1575 = vst [vmem:[%s1560 + $0x70] sm:$0xff] %v1553
          %1576 = vst [vmem:[%s1560 + $0x78] sm:$0xff] %v1554
          %v1577 = vld [vmem:[#allocation8] sm:$0x1]
          %v1579 = vlaneseq
          %v1580 = vshrl.u32 %v1579, 7
          %v1581 = vsub.s32 0, %v1580
          %v1582 = vrot.slane %v1577, %v1581
          %v1584 = vadd.f32 %v1413, %v1582
          %v1585 = vadd.f32 %v1416, %v1582
          %v1586 = vadd.f32 %v1421, %v1582
          %v1587 = vadd.f32 %v1424, %v1582
          %v1588 = vadd.f32 %v1429, %v1582
          %v1589 = vadd.f32 %v1432, %v1582
          %v1590 = vadd.f32 %v1437, %v1582
          %v1591 = vadd.f32 %v1440, %v1582
          %v1592 = vadd.f32 %v1445, %v1582
          %v1593 = vadd.f32 %v1448, %v1582
          %v1594 = vadd.f32 %v1453, %v1582
          %v1595 = vadd.f32 %v1456, %v1582
          %v1596 = vadd.f32 %v1461, %v1582
          %v1597 = vadd.f32 %v1464, %v1582
          %v1598 = vadd.f32 %v1469, %v1582
          %v1599 = vadd.f32 %v1472, %v1582
          %v1600 = vadd.f32 %v1477, %v1582
          %v1601 = vadd.f32 %v1480, %v1582
          %v1602 = vadd.f32 %v1485, %v1582
          %v1603 = vadd.f32 %v1488, %v1582
          %v1604 = vadd.f32 %v1493, %v1582
          %v1605 = vadd.f32 %v1496, %v1582
          %v1606 = vadd.f32 %v1501, %v1582
          %v1607 = vadd.f32 %v1504, %v1582
          %v1608 = vadd.f32 %v1509, %v1582
          %v1609 = vadd.f32 %v1512, %v1582
          %v1610 = vadd.f32 %v1517, %v1582
          %v1611 = vadd.f32 %v1520, %v1582
          %v1612 = vadd.f32 %v1525, %v1582
          %v1613 = vadd.f32 %v1528, %v1582
          %v1614 = vadd.f32 %v1533, %v1582
          %v1615 = vadd.f32 %v1536, %v1582
          %1616 = vst [vmem:[%s307] sm:$0xff] %v1584
          %1617 = vst [vmem:[%s307 + $0x8] sm:$0xff] %v1585
          %1618 = vst [vmem:[%s307 + $0x10] sm:$0xff] %v1586
          %1619 = vst [vmem:[%s307 + $0x18] sm:$0xff] %v1587
          %1620 = vst [vmem:[%s307 + $0x20] sm:$0xff] %v1588
          %1621 = vst [vmem:[%s307 + $0x28] sm:$0xff] %v1589
          %1622 = vst [vmem:[%s307 + $0x30] sm:$0xff] %v1590
          %1623 = vst [vmem:[%s307 + $0x38] sm:$0xff] %v1591
          %1624 = vst [vmem:[%s307 + $0x40] sm:$0xff] %v1592
          %1625 = vst [vmem:[%s307 + $0x48] sm:$0xff] %v1593
          %1626 = vst [vmem:[%s307 + $0x50] sm:$0xff] %v1594
          %1627 = vst [vmem:[%s307 + $0x58] sm:$0xff] %v1595
          %1628 = vst [vmem:[%s307 + $0x60] sm:$0xff] %v1596
          %1629 = vst [vmem:[%s307 + $0x68] sm:$0xff] %v1597
          %1630 = vst [vmem:[%s307 + $0x70] sm:$0xff] %v1598
          %1631 = vst [vmem:[%s307 + $0x78] sm:$0xff] %v1599
          %1632 = vst [vmem:[%s307 + $0x80] sm:$0xff] %v1600
          %1633 = vst [vmem:[%s307 + $0x88] sm:$0xff] %v1601
          %1634 = vst [vmem:[%s307 + $0x90] sm:$0xff] %v1602
          %1635 = vst [vmem:[%s307 + $0x98] sm:$0xff] %v1603
          %1636 = vst [vmem:[%s307 + $0xa0] sm:$0xff] %v1604
          %1637 = vst [vmem:[%s307 + $0xa8] sm:$0xff] %v1605
          %1638 = vst [vmem:[%s307 + $0xb0] sm:$0xff] %v1606
          %1639 = vst [vmem:[%s307 + $0xb8] sm:$0xff] %v1607
          %1640 = vst [vmem:[%s307 + $0xc0] sm:$0xff] %v1608
          %1641 = vst [vmem:[%s307 + $0xc8] sm:$0xff] %v1609
          %1642 = vst [vmem:[%s307 + $0xd0] sm:$0xff] %v1610
          %1643 = vst [vmem:[%s307 + $0xd8] sm:$0xff] %v1611
          %1644 = vst [vmem:[%s307 + $0xe0] sm:$0xff] %v1612
          %1645 = vst [vmem:[%s307 + $0xe8] sm:$0xff] %v1613
          %1646 = vst [vmem:[%s307 + $0xf0] sm:$0xff] %v1614
          %1647 = vst [vmem:[%s307 + $0xf8] sm:$0xff] %v1615
        $region60: #{dense_ngcn_forward.1} parent=35 // pred_fallthru
          _
        %s1648 = sand.u32 %s147, 1
        %s1649 = scalar_lea.sflag [#allocation5], %s1648
        %s1650 = sand.u32 %s147, 1
        %s1651 = smul.addr %s1650, 256
        %s1652 = scalar_lea.vmem [#allocation11], %s1651
        // Predicated region
        $region61: #{dense_ngcn_forward.1} parent=35 // pred_check
          %p1653 = pneg %p157
        $region62: #{dense_ngcn_forward.1} parent=35 // pred_check_branch
          %1655 = sbr.rel (%p1653) target = $region64
        $region63: #{dense_ngcn_forward.1} parent=35 // pred_region
          %s1656 = smul.u32 32, %s30
          %s1658 = ssub.s32 4096, 4096
          %1659 = vsyncadd %s1649, %s1658
          %s1660 = smul.addr %s1656, 128
          %s1661 = scalar_lea.hbm %s4, %s1660
          %s1662 = sshll.u32 %s1652, 4
          %s1663 = int_to_ptr.vmem [resolvable:$true] %s1662
          %1668 = dma.vmem_to_hbm [thread:$0]  %s1663, 4096, %s1661, %s1649, 128, 128, 8
        $region64: #{dense_ngcn_forward.1} parent=35 // pred_fallthru
          _
      $region36: #{dense_ngcn_forward.1} parent=5 // pred_fallthru
        _
      %p1669 = scmp.le.s32.totalorder 2, %s20
      // Predicated region
      $region65: #{dense_ngcn_forward.1} parent=5 // pred_check
        %p1670 = pneg %p1669
      $region66: #{dense_ngcn_forward.1} parent=5 // pred_check_branch
        %1672 = sbr.rel (%p1670) target = $region68
      $region67: #{dense_ngcn_forward.1} parent=5 // pred_region
        %s1673 = ssub.s32 %s20, 2
        // Predicated region
        $region69: #{dense_ngcn_forward.1} parent=67 // pred_check
          %p1674 = pneg %p163
        $region70: #{dense_ngcn_forward.1} parent=67 // pred_check_branch
          %1676 = sbr.rel (%p1674) target = $region72
        $region71: #{dense_ngcn_forward.1} parent=67 // pred_region
          %s1677 = sand.u32 %s148, 1
          %s1678 = scalar_lea.sflag [#allocation5], %s1677
          %s1679 = sand.u32 %s148, 1
          %s1680 = smul.addr %s1679, 256
          %s1681 = scalar_lea.vmem [#allocation11], %s1680
          %1682 = dma.done %s1678, 4096
        $region72: #{dense_ngcn_forward.1} parent=67 // pred_fallthru
          _
      $region68: #{dense_ngcn_forward.1} parent=5 // pred_fallthru
        _
    $region6: #{dense_ngcn_forward.1} parent=1 // loop_footer
      %s24 = sadd.s32 1, %s20
    $region7: #{dense_ngcn_forward.1} parent=1 // loop_footer_branch
      %19 = sbr.rel target = $region3
    $region8: #{dense_ngcn_forward.1} parent=1 // loop_exit
      _
    %1683 = vsyncpa [#allocation4], 1
    %s1684 = scalar_lea.sflag [#allocation4], 1
    %1685 = vsyncpa %s1684, 1
    %1686 = vsyncpa [#allocation7], 1
    %1687 = vsyncpa [#allocation10], 1
    %s1688 = scalar_lea.sflag [#allocation10], 1
    %1689 = vsyncpa %s1688, 1
    %1690 = vsyncpa [#allocation5], 1
    %s1691 = scalar_lea.sflag [#allocation5], 1
    %1692 = vsyncpa %s1691, 1

</llo_original>
